<compile_context>
chip_gen: v7x
topology: tpu7x:2x2x1
jax: 0.10.0
libtpu: 0.0.40
codegen_flags: <defaults>
</compile_context>

<pallas_src>
import jax
import jax.numpy as jnp
from jax.experimental import pallas as pl
from jax.experimental.pallas import tpu as pltpu


# ---------------------------------------------------------------------------
# Kernel
# ---------------------------------------------------------------------------
def _conv_bn_upsample_kernel(w_ref, b_ref, x_ref, e_ref, o_ref):
    # w_ref: SMEM (Cout, Cin)        scale-folded 1x1 conv weights
    # b_ref: SMEM (Cout,)            folded BN bias
    # x_ref: VMEM (1, Cin, tr, mW)   packed input tile (m rows per lane group)
    # e_ref: VMEM (mW, 4*mW)         0/1 combined 2x-upsample expander (constant block)
    # o_ref: VMEM (1, Cout, tr, 4*mW) packed, already-upsampled output tile
    _, cin, tr, _ = x_ref.shape
    cout = o_ref.shape[1]
    ow = o_ref.shape[3]

    # Load each input-channel slab exactly once (native dtype; promoted per-use).
    xs = [x_ref[0, ci, :, :] for ci in range(cin)]

    def conv_channel(co):
        # 1x1 conv + folded BN: a few VPU FMAs with SMEM scalar weights.
        z = xs[0] * w_ref[co, 0]
        for ci in range(1, cin):
            z = z + xs[ci] * w_ref[co, ci]
        return (z + b_ref[co]).astype(jnp.float32)          # (tr, mW)

    e = e_ref[...]                                           # (mW, 4*mW), 0/1 f32

    if tr % 8 == 0:
        # Batched path: one MXU dot for all channels (expander RHS pushed once),
        # one lane-dense block store.  Concat pieces are 8-sublane aligned.
        z_all = jnp.concatenate([conv_channel(co) for co in range(cout)], axis=0)
        up = jnp.dot(z_all, e, preferred_element_type=jnp.float32)   # (Cout*tr, 4*mW)
        o_ref[0, :, :, :] = up.reshape(cout, tr, ow).astype(o_ref.dtype)
    else:
        # Small-tile fallback: per-channel dot + per-channel (still lane-dense) store.
        for co in range(cout):
            z = conv_channel(co)
            up = jnp.dot(z, e, preferred_element_type=jnp.float32)   # (tr, 4*mW)
            o_ref[0, co, :, :] = up.astype(o_ref.dtype)


# ---------------------------------------------------------------------------
# Wrapper helpers
# ---------------------------------------------------------------------------
def _make_expander(m, W, dtype=jnp.float32):
    """0/1 matrix E (m*W, 4*m*W) doing BOTH column + row duplication of a 2x nearest
    upsample in the packed-row layout:
        packed in  row:  [ y[r0], y[r0+1], ..., y[r0+m-1] ]                 (m*W wide)
        packed out row:  [ dup(y[r0]), dup(y[r0]), dup(y[r0+1]), dup(y[r0+1]), ... ]
    i.e. E[t*W + j, (2t+a)*2W + 2j + b] = 1 for a, b in {0, 1}.
    """
    p = jnp.arange(m * W, dtype=jnp.int32)
    q = jnp.arange(4 * m * W, dtype=jnp.int32)
    t, j = p // W, p % W
    qt, qj = q // (4 * W), (q % (2 * W)) // 2
    return ((qt[None, :] == t[:, None]) & (qj[None, :] == j[:, None])).astype(dtype)


def _pick_row_pack(H, W):
    """Rows packed per lane group: smallest m with H % m == 0 and (m*W) % 32 == 0
    (output block lane width 4*m*W a multiple of 128), preferring m*W >= 128 so the
    input block is also lane-dense."""
    best = None
    for m in range(1, H + 1):
        if H % m or (m * W) % 32:
            continue
        if best is None:
            best = m
        if m * W >= 128:
            return m
    return best if best is not None else 1


def _pick_row_tile(N, R, mW, Cin, Cout, itemsize, budget, prefer_multistep):
    """Largest packed-row tile (divisor of R, full R or a multiple of 8) whose
    double-buffered blocks + expander + in-kernel temporaries fit the budget."""
    cands = [R] + [t for t in range(8 * (R // 8), 0, -8) if t != R and R % t == 0]
    OW = 4 * mW

    def vmem_bytes(tr):
        sub = max(tr, 8)                               # sublane padding
        lane_in = ((mW + 127) // 128) * 128            # lane padding of input block
        in_blk = Cin * sub * lane_in * itemsize
        out_blk = Cout * sub * OW * itemsize
        expander = mW * OW * 4
        temps = (Cin * sub * lane_in                   # loaded x slabs
                 + 2 * Cout * sub * mW                 # per-channel z + concat copy
                 + Cout * sub * OW) * 4                # expander matmul result (f32)
        return 2 * (in_blk + out_blk) + 2 * expander + temps

    fitting = [t for t in cands if vmem_bytes(t) <= budget] or [cands[-1]]
    if prefer_multistep:                               # keep both v7x TensorCores busy
        multi = [t for t in fitting if N * (R // t) >= 2]
        if multi:
            return multi[0]
    return fitting[0]


# ---------------------------------------------------------------------------
# Forward
# ---------------------------------------------------------------------------
def upsampling_forward(x_nchw, conv_w, bn_gamma, bn_beta, bn_mean, bn_var, eps=1e-5):
    """Forward of UpSampling (kernel_size=1, the module default)."""
    # TODO(synk): kernel_size > 1 conv (with padding=k//2) is not implemented;
    #             the module's default (and the test) uses kernel_size=1.
    # TODO(synk): for very large W (>= several hundred) a column-tiled variant with a
    #             smaller expander would reduce MXU work; not needed at these shapes.
    N, Cin, H, W = x_nchw.shape
    Cout = conv_w.shape[0]
    assert conv_w.shape[2] == 1 and conv_w.shape[3] == 1, "only 1x1 conv supported"

    # Fold inference-mode BatchNorm2d: scale into the weight, bias stays.
    scale = bn_gamma / jnp.sqrt(bn_var + eps)                     # (Cout,)
    bias = bn_beta - bn_mean * scale                              # (Cout,)
    w_s = conv_w.reshape(Cout, Cin) * scale[:, None]              # (Cout, Cin)

    # Lane-dense packing (free reshapes on both sides).
    m = _pick_row_pack(H, W)
    R, mW, OW = H // m, m * W, 4 * m * W
    x_packed = x_nchw.reshape(N, Cin, R, mW)
    expander = _make_expander(m, W)                               # (mW, OW) f32

    # Per-chip VMEM limit (v7x: 64 MiB, v5e/v6e: 128 MiB), with headroom.
    try:
        vmem_cap = int(pltpu.get_tpu_info().vmem_capacity_bytes)
    except Exception:
        vmem_cap = 64 * 1024 * 1024
    vmem_limit = int(min(max(vmem_cap - (16 << 20), 32 << 20), 96 << 20))
    prefer_multistep = vmem_cap <= (64 << 20)                     # v7x-like: 2 TCs

    itemsize = jnp.dtype(x_nchw.dtype).itemsize
    tr = _pick_row_tile(N, R, mW, Cin, Cout, itemsize,
                        budget=vmem_limit // 2, prefer_multistep=prefer_multistep)
    grid = (N, R // tr)

    out_packed = pl.pallas_call(
        _conv_bn_upsample_kernel,
        out_shape=jax.ShapeDtypeStruct((N, Cout, R, OW), x_nchw.dtype),
        grid=grid,
        in_specs=[
            pl.BlockSpec(memory_space=pltpu.MemorySpace.SMEM),            # weights
            pl.BlockSpec(memory_space=pltpu.MemorySpace.SMEM),            # bias
            pl.BlockSpec((1, Cin, tr, mW), lambda n, h: (n, 0, h, 0)),    # x tile
            pl.BlockSpec((mW, OW), lambda n, h: (0, 0)),                  # expander (resident)
        ],
        out_specs=pl.BlockSpec((1, Cout, tr, OW), lambda n, h: (n, 0, h, 0)),
        compiler_params=pltpu.CompilerParams(
            dimension_semantics=("parallel", "parallel"),
            vmem_limit_bytes=vmem_limit),
    )(w_s.astype(jnp.float32), bias.astype(jnp.float32), x_packed, expander)

    # Free reshape back to NCHW (the packed layout is exactly the row-major order
    # of the upsampled image).
    return out_packed.reshape(N, Cout, 2 * H, 2 * W)


# ---------------------------------------------------------------------------
# Self-test
# ---------------------------------------------------------------------------
if __name__ == "__main__":
    key = jax.random.PRNGKey(0)
    k1, k2, k3, k4, k5, k6 = jax.random.split(key, 6)

    N, Cin, H, W = 2, 4, 16, 16
    Cout = 8

    x = jax.random.normal(k1, (N, Cin, H, W), dtype=jnp.float32)
    conv_w = 0.1 * jax.random.normal(k2, (Cout, Cin, 1, 1), dtype=jnp.float32)
    gamma = 1.0 + 0.1 * jax.random.normal(k3, (Cout,), dtype=jnp.float32)
    beta = 0.1 * jax.random.normal(k4, (Cout,), dtype=jnp.float32)
    running_mean = 0.1 * jax.random.normal(k5, (Cout,), dtype=jnp.float32)
    running_var = jnp.abs(
        1.0 + 0.1 * jax.random.normal(k6, (Cout,), dtype=jnp.float32))

    def reference(x, conv_w, gamma, beta, mean, var, eps=1e-5):
        co, ci = conv_w.shape[0], conv_w.shape[1]
        scale = gamma / jnp.sqrt(var + eps)
        bias = beta - mean * scale
        y = jnp.einsum("nchw,oc->nohw", x, conv_w.reshape(co, ci))
        y = y * scale[None, :, None, None] + bias[None, :, None, None]
        return jnp.repeat(jnp.repeat(y, 2, axis=2), 2, axis=3)

    out = jax.block_until_ready(
        upsampling_forward(x, conv_w, gamma, beta, running_mean, running_var))
    ref = reference(x, conv_w, gamma, beta, running_mean, running_var)
    assert out.shape == (N, Cout, 2 * H, 2 * W)
    assert jnp.allclose(out, ref, atol=1e-5, rtol=1e-5)

    # Taller image exercises the batched-channel MXU path (tr % 8 == 0).
    x2 = jax.random.normal(k1, (1, Cin, 64, W), dtype=jnp.float32)
    out2 = jax.block_until_ready(
        upsampling_forward(x2, conv_w, gamma, beta, running_mean, running_var))
    ref2 = reference(x2, conv_w, gamma, beta, running_mean, running_var)
    assert out2.shape == (1, Cout, 128, 2 * W)
    assert jnp.allclose(out2, ref2, atol=1e-5, rtol=1e-5)

    print("KERNEL_OK")
</pallas_src>

<mosaic_0001>
module attributes {stable_mosaic.version = 11 : i64} {
  func.func @_conv_bn_upsample_kernel(%arg0: i32, %arg1: i32, %arg2: memref<8x4xf32, #tpu.memory_space<smem>>, %arg3: memref<8xf32, #tpu.memory_space<smem>>, %arg4: memref<1x4x2x128xf32, #tpu.memory_space<vmem>>, %arg5: memref<128x512xf32, #tpu.memory_space<vmem>>, %arg6: memref<1x8x2x512xf32, #tpu.memory_space<vmem>>) attributes {dimension_semantics = [#tpu.dimension_semantics<parallel>, #tpu.dimension_semantics<parallel>], iteration_bounds = array<i64: 2, 1>, scalar_prefetch = 0 : i64, scratch_operands = 0 : i64, tpu.core_type = #tpu.core_type<tc>, window_params = [{transform_indices = @transform_0, window_bounds = array<i64: 8, 4>}, {transform_indices = @transform_1, window_bounds = array<i64: 8>}, {transform_indices = @transform_2, window_bounds = array<i64: 1, 4, 2, 128>}, {pipeline_mode = #tpu.pipeline_mode<synchronous>, transform_indices = @transform_3, window_bounds = array<i64: 128, 512>}, {transform_indices = @transform_4, window_bounds = array<i64: 1, 8, 2, 512>}]} {
    %c0 = arith.constant 0 : index
    %c0_0 = arith.constant 0 : index
    %c0_1 = arith.constant 0 : index
    %c0_2 = arith.constant 0 : index
    %0 = vector.load %arg4[%c0, %c0_0, %c0_1, %c0_2] : memref<1x4x2x128xf32, #tpu.memory_space<vmem>>, vector<1x1x2x128xf32>
    %1 = vector.shape_cast %0 : vector<1x1x2x128xf32> to vector<2x128xf32>
    %c0_3 = arith.constant 0 : index
    %c1 = arith.constant 1 : index
    %c0_4 = arith.constant 0 : index
    %c0_5 = arith.constant 0 : index
    %2 = vector.load %arg4[%c0_3, %c1, %c0_4, %c0_5] : memref<1x4x2x128xf32, #tpu.memory_space<vmem>>, vector<1x1x2x128xf32>
    %3 = vector.shape_cast %2 : vector<1x1x2x128xf32> to vector<2x128xf32>
    %c0_6 = arith.constant 0 : index
    %c2 = arith.constant 2 : index
    %c0_7 = arith.constant 0 : index
    %c0_8 = arith.constant 0 : index
    %4 = vector.load %arg4[%c0_6, %c2, %c0_7, %c0_8] : memref<1x4x2x128xf32, #tpu.memory_space<vmem>>, vector<1x1x2x128xf32>
    %5 = vector.shape_cast %4 : vector<1x1x2x128xf32> to vector<2x128xf32>
    %c0_9 = arith.constant 0 : index
    %c3 = arith.constant 3 : index
    %c0_10 = arith.constant 0 : index
    %c0_11 = arith.constant 0 : index
    %6 = vector.load %arg4[%c0_9, %c3, %c0_10, %c0_11] : memref<1x4x2x128xf32, #tpu.memory_space<vmem>>, vector<1x1x2x128xf32>
    %7 = vector.shape_cast %6 : vector<1x1x2x128xf32> to vector<2x128xf32>
    %c0_12 = arith.constant 0 : index
    %c0_13 = arith.constant 0 : index
    %8 = vector.load %arg5[%c0_12, %c0_13] : memref<128x512xf32, #tpu.memory_space<vmem>>, vector<128x512xf32>
    %c0_14 = arith.constant 0 : index
    %c0_15 = arith.constant 0 : index
    %9 = memref.load %arg2[%c0_14, %c0_15] : memref<8x4xf32, #tpu.memory_space<smem>>
    %10 = vector.broadcast %9 : f32 to vector<2x128xf32>
    %11 = arith.mulf %1, %10 : vector<2x128xf32>
    %c0_16 = arith.constant 0 : index
    %c1_17 = arith.constant 1 : index
    %12 = memref.load %arg2[%c0_16, %c1_17] : memref<8x4xf32, #tpu.memory_space<smem>>
    %13 = vector.broadcast %12 : f32 to vector<2x128xf32>
    %14 = arith.mulf %3, %13 : vector<2x128xf32>
    %15 = arith.addf %11, %14 : vector<2x128xf32>
    %c0_18 = arith.constant 0 : index
    %c2_19 = arith.constant 2 : index
    %16 = memref.load %arg2[%c0_18, %c2_19] : memref<8x4xf32, #tpu.memory_space<smem>>
    %17 = vector.broadcast %16 : f32 to vector<2x128xf32>
    %18 = arith.mulf %5, %17 : vector<2x128xf32>
    %19 = arith.addf %15, %18 : vector<2x128xf32>
    %c0_20 = arith.constant 0 : index
    %c3_21 = arith.constant 3 : index
    %20 = memref.load %arg2[%c0_20, %c3_21] : memref<8x4xf32, #tpu.memory_space<smem>>
    %21 = vector.broadcast %20 : f32 to vector<2x128xf32>
    %22 = arith.mulf %7, %21 : vector<2x128xf32>
    %23 = arith.addf %19, %22 : vector<2x128xf32>
    %c0_22 = arith.constant 0 : index
    %24 = memref.load %arg3[%c0_22] : memref<8xf32, #tpu.memory_space<smem>>
    %25 = vector.broadcast %24 : f32 to vector<2x128xf32>
    %26 = arith.addf %23, %25 : vector<2x128xf32>
    %cst = arith.constant dense<0.000000e+00> : vector<2x512xf32>
    %27 = tpu.matmul %26, %8, %cst {dimension_numbers = #tpu.dot_dimension_numbers<[1], [0], [0], [1], [0, 0, 1, 1], [], []>} : vector<2x128xf32>, vector<128x512xf32>, vector<2x512xf32> -> vector<2x512xf32>
    %c0_23 = arith.constant 0 : index
    %c0_24 = arith.constant 0 : index
    %c0_25 = arith.constant 0 : index
    %c0_26 = arith.constant 0 : index
    %28 = vector.load %arg6[%c0_23, %c0_24, %c0_25, %c0_26] : memref<1x8x2x512xf32, #tpu.memory_space<vmem>>, vector<1x1x2x512xf32>
    %29 = vector.shape_cast %28 : vector<1x1x2x512xf32> to vector<2x512xf32>
    %30 = vector.shape_cast %27 : vector<2x512xf32> to vector<1x1x2x512xf32>
    tpu.vector_store %arg6[%c0_23, %c0_24, %c0_25, %c0_26], %30 {strides = array<i32>} : memref<1x8x2x512xf32, #tpu.memory_space<vmem>>, vector<1x1x2x512xf32>,
    %c1_27 = arith.constant 1 : index
    %c0_28 = arith.constant 0 : index
    %31 = memref.load %arg2[%c1_27, %c0_28] : memref<8x4xf32, #tpu.memory_space<smem>>
    %32 = vector.broadcast %31 : f32 to vector<2x128xf32>
    %33 = arith.mulf %1, %32 : vector<2x128xf32>
    %c1_29 = arith.constant 1 : index
    %c1_30 = arith.constant 1 : index
    %34 = memref.load %arg2[%c1_29, %c1_30] : memref<8x4xf32, #tpu.memory_space<smem>>
    %35 = vector.broadcast %34 : f32 to vector<2x128xf32>
    %36 = arith.mulf %3, %35 : vector<2x128xf32>
    %37 = arith.addf %33, %36 : vector<2x128xf32>
    %c1_31 = arith.constant 1 : index
    %c2_32 = arith.constant 2 : index
    %38 = memref.load %arg2[%c1_31, %c2_32] : memref<8x4xf32, #tpu.memory_space<smem>>
    %39 = vector.broadcast %38 : f32 to vector<2x128xf32>
    %40 = arith.mulf %5, %39 : vector<2x128xf32>
    %41 = arith.addf %37, %40 : vector<2x128xf32>
    %c1_33 = arith.constant 1 : index
    %c3_34 = arith.constant 3 : index
    %42 = memref.load %arg2[%c1_33, %c3_34] : memref<8x4xf32, #tpu.memory_space<smem>>
    %43 = vector.broadcast %42 : f32 to vector<2x128xf32>
    %44 = arith.mulf %7, %43 : vector<2x128xf32>
    %45 = arith.addf %41, %44 : vector<2x128xf32>
    %c1_35 = arith.constant 1 : index
    %46 = memref.load %arg3[%c1_35] : memref<8xf32, #tpu.memory_space<smem>>
    %47 = vector.broadcast %46 : f32 to vector<2x128xf32>
    %48 = arith.addf %45, %47 : vector<2x128xf32>
    %cst_36 = arith.constant dense<0.000000e+00> : vector<2x512xf32>
    %49 = tpu.matmul %48, %8, %cst_36 {dimension_numbers = #tpu.dot_dimension_numbers<[1], [0], [0], [1], [0, 0, 1, 1], [], []>} : vector<2x128xf32>, vector<128x512xf32>, vector<2x512xf32> -> vector<2x512xf32>
    %c0_37 = arith.constant 0 : index
    %c1_38 = arith.constant 1 : index
    %c0_39 = arith.constant 0 : index
    %c0_40 = arith.constant 0 : index
    %50 = vector.load %arg6[%c0_37, %c1_38, %c0_39, %c0_40] : memref<1x8x2x512xf32, #tpu.memory_space<vmem>>, vector<1x1x2x512xf32>
    %51 = vector.shape_cast %50 : vector<1x1x2x512xf32> to vector<2x512xf32>
    %52 = vector.shape_cast %49 : vector<2x512xf32> to vector<1x1x2x512xf32>
    tpu.vector_store %arg6[%c0_37, %c1_38, %c0_39, %c0_40], %52 {strides = array<i32>} : memref<1x8x2x512xf32, #tpu.memory_space<vmem>>, vector<1x1x2x512xf32>,
    %c2_41 = arith.constant 2 : index
    %c0_42 = arith.constant 0 : index
    %53 = memref.load %arg2[%c2_41, %c0_42] : memref<8x4xf32, #tpu.memory_space<smem>>
    %54 = vector.broadcast %53 : f32 to vector<2x128xf32>
    %55 = arith.mulf %1, %54 : vector<2x128xf32>
    %c2_43 = arith.constant 2 : index
    %c1_44 = arith.constant 1 : index
    %56 = memref.load %arg2[%c2_43, %c1_44] : memref<8x4xf32, #tpu.memory_space<smem>>
    %57 = vector.broadcast %56 : f32 to vector<2x128xf32>
    %58 = arith.mulf %3, %57 : vector<2x128xf32>
    %59 = arith.addf %55, %58 : vector<2x128xf32>
    %c2_45 = arith.constant 2 : index
    %c2_46 = arith.constant 2 : index
    %60 = memref.load %arg2[%c2_45, %c2_46] : memref<8x4xf32, #tpu.memory_space<smem>>
    %61 = vector.broadcast %60 : f32 to vector<2x128xf32>
    %62 = arith.mulf %5, %61 : vector<2x128xf32>
    %63 = arith.addf %59, %62 : vector<2x128xf32>
    %c2_47 = arith.constant 2 : index
    %c3_48 = arith.constant 3 : index
    %64 = memref.load %arg2[%c2_47, %c3_48] : memref<8x4xf32, #tpu.memory_space<smem>>
    %65 = vector.broadcast %64 : f32 to vector<2x128xf32>
    %66 = arith.mulf %7, %65 : vector<2x128xf32>
    %67 = arith.addf %63, %66 : vector<2x128xf32>
    %c2_49 = arith.constant 2 : index
    %68 = memref.load %arg3[%c2_49] : memref<8xf32, #tpu.memory_space<smem>>
    %69 = vector.broadcast %68 : f32 to vector<2x128xf32>
    %70 = arith.addf %67, %69 : vector<2x128xf32>
    %cst_50 = arith.constant dense<0.000000e+00> : vector<2x512xf32>
    %71 = tpu.matmul %70, %8, %cst_50 {dimension_numbers = #tpu.dot_dimension_numbers<[1], [0], [0], [1], [0, 0, 1, 1], [], []>} : vector<2x128xf32>, vector<128x512xf32>, vector<2x512xf32> -> vector<2x512xf32>
    %c0_51 = arith.constant 0 : index
    %c2_52 = arith.constant 2 : index
    %c0_53 = arith.constant 0 : index
    %c0_54 = arith.constant 0 : index
    %72 = vector.load %arg6[%c0_51, %c2_52, %c0_53, %c0_54] : memref<1x8x2x512xf32, #tpu.memory_space<vmem>>, vector<1x1x2x512xf32>
    %73 = vector.shape_cast %72 : vector<1x1x2x512xf32> to vector<2x512xf32>
    %74 = vector.shape_cast %71 : vector<2x512xf32> to vector<1x1x2x512xf32>
    tpu.vector_store %arg6[%c0_51, %c2_52, %c0_53, %c0_54], %74 {strides = array<i32>} : memref<1x8x2x512xf32, #tpu.memory_space<vmem>>, vector<1x1x2x512xf32>,
    %c3_55 = arith.constant 3 : index
    %c0_56 = arith.constant 0 : index
    %75 = memref.load %arg2[%c3_55, %c0_56] : memref<8x4xf32, #tpu.memory_space<smem>>
    %76 = vector.broadcast %75 : f32 to vector<2x128xf32>
    %77 = arith.mulf %1, %76 : vector<2x128xf32>
    %c3_57 = arith.constant 3 : index
    %c1_58 = arith.constant 1 : index
    %78 = memref.load %arg2[%c3_57, %c1_58] : memref<8x4xf32, #tpu.memory_space<smem>>
    %79 = vector.broadcast %78 : f32 to vector<2x128xf32>
    %80 = arith.mulf %3, %79 : vector<2x128xf32>
    %81 = arith.addf %77, %80 : vector<2x128xf32>
    %c3_59 = arith.constant 3 : index
    %c2_60 = arith.constant 2 : index
    %82 = memref.load %arg2[%c3_59, %c2_60] : memref<8x4xf32, #tpu.memory_space<smem>>
    %83 = vector.broadcast %82 : f32 to vector<2x128xf32>
    %84 = arith.mulf %5, %83 : vector<2x128xf32>
    %85 = arith.addf %81, %84 : vector<2x128xf32>
    %c3_61 = arith.constant 3 : index
    %c3_62 = arith.constant 3 : index
    %86 = memref.load %arg2[%c3_61, %c3_62] : memref<8x4xf32, #tpu.memory_space<smem>>
    %87 = vector.broadcast %86 : f32 to vector<2x128xf32>
    %88 = arith.mulf %7, %87 : vector<2x128xf32>
    %89 = arith.addf %85, %88 : vector<2x128xf32>
    %c3_63 = arith.constant 3 : index
    %90 = memref.load %arg3[%c3_63] : memref<8xf32, #tpu.memory_space<smem>>
    %91 = vector.broadcast %90 : f32 to vector<2x128xf32>
    %92 = arith.addf %89, %91 : vector<2x128xf32>
    %cst_64 = arith.constant dense<0.000000e+00> : vector<2x512xf32>
    %93 = tpu.matmul %92, %8, %cst_64 {dimension_numbers = #tpu.dot_dimension_numbers<[1], [0], [0], [1], [0, 0, 1, 1], [], []>} : vector<2x128xf32>, vector<128x512xf32>, vector<2x512xf32> -> vector<2x512xf32>
    %c0_65 = arith.constant 0 : index
    %c3_66 = arith.constant 3 : index
    %c0_67 = arith.constant 0 : index
    %c0_68 = arith.constant 0 : index
    %94 = vector.load %arg6[%c0_65, %c3_66, %c0_67, %c0_68] : memref<1x8x2x512xf32, #tpu.memory_space<vmem>>, vector<1x1x2x512xf32>
    %95 = vector.shape_cast %94 : vector<1x1x2x512xf32> to vector<2x512xf32>
    %96 = vector.shape_cast %93 : vector<2x512xf32> to vector<1x1x2x512xf32>
    tpu.vector_store %arg6[%c0_65, %c3_66, %c0_67, %c0_68], %96 {strides = array<i32>} : memref<1x8x2x512xf32, #tpu.memory_space<vmem>>, vector<1x1x2x512xf32>,
    %c4 = arith.constant 4 : index
    %c0_69 = arith.constant 0 : index
    %97 = memref.load %arg2[%c4, %c0_69] : memref<8x4xf32, #tpu.memory_space<smem>>
    %98 = vector.broadcast %97 : f32 to vector<2x128xf32>
    %99 = arith.mulf %1, %98 : vector<2x128xf32>
    %c4_70 = arith.constant 4 : index
    %c1_71 = arith.constant 1 : index
    %100 = memref.load %arg2[%c4_70, %c1_71] : memref<8x4xf32, #tpu.memory_space<smem>>
    %101 = vector.broadcast %100 : f32 to vector<2x128xf32>
    %102 = arith.mulf %3, %101 : vector<2x128xf32>
    %103 = arith.addf %99, %102 : vector<2x128xf32>
    %c4_72 = arith.constant 4 : index
    %c2_73 = arith.constant 2 : index
    %104 = memref.load %arg2[%c4_72, %c2_73] : memref<8x4xf32, #tpu.memory_space<smem>>
    %105 = vector.broadcast %104 : f32 to vector<2x128xf32>
    %106 = arith.mulf %5, %105 : vector<2x128xf32>
    %107 = arith.addf %103, %106 : vector<2x128xf32>
    %c4_74 = arith.constant 4 : index
    %c3_75 = arith.constant 3 : index
    %108 = memref.load %arg2[%c4_74, %c3_75] : memref<8x4xf32, #tpu.memory_space<smem>>
    %109 = vector.broadcast %108 : f32 to vector<2x128xf32>
    %110 = arith.mulf %7, %109 : vector<2x128xf32>
    %111 = arith.addf %107, %110 : vector<2x128xf32>
    %c4_76 = arith.constant 4 : index
    %112 = memref.load %arg3[%c4_76] : memref<8xf32, #tpu.memory_space<smem>>
    %113 = vector.broadcast %112 : f32 to vector<2x128xf32>
    %114 = arith.addf %111, %113 : vector<2x128xf32>
    %cst_77 = arith.constant dense<0.000000e+00> : vector<2x512xf32>
    %115 = tpu.matmul %114, %8, %cst_77 {dimension_numbers = #tpu.dot_dimension_numbers<[1], [0], [0], [1], [0, 0, 1, 1], [], []>} : vector<2x128xf32>, vector<128x512xf32>, vector<2x512xf32> -> vector<2x512xf32>
    %c0_78 = arith.constant 0 : index
    %c4_79 = arith.constant 4 : index
    %c0_80 = arith.constant 0 : index
    %c0_81 = arith.constant 0 : index
    %116 = vector.load %arg6[%c0_78, %c4_79, %c0_80, %c0_81] : memref<1x8x2x512xf32, #tpu.memory_space<vmem>>, vector<1x1x2x512xf32>
    %117 = vector.shape_cast %116 : vector<1x1x2x512xf32> to vector<2x512xf32>
    %118 = vector.shape_cast %115 : vector<2x512xf32> to vector<1x1x2x512xf32>
    tpu.vector_store %arg6[%c0_78, %c4_79, %c0_80, %c0_81], %118 {strides = array<i32>} : memref<1x8x2x512xf32, #tpu.memory_space<vmem>>, vector<1x1x2x512xf32>,
    %c5 = arith.constant 5 : index
    %c0_82 = arith.constant 0 : index
    %119 = memref.load %arg2[%c5, %c0_82] : memref<8x4xf32, #tpu.memory_space<smem>>
    %120 = vector.broadcast %119 : f32 to vector<2x128xf32>
    %121 = arith.mulf %1, %120 : vector<2x128xf32>
    %c5_83 = arith.constant 5 : index
    %c1_84 = arith.constant 1 : index
    %122 = memref.load %arg2[%c5_83, %c1_84] : memref<8x4xf32, #tpu.memory_space<smem>>
    %123 = vector.broadcast %122 : f32 to vector<2x128xf32>
    %124 = arith.mulf %3, %123 : vector<2x128xf32>
    %125 = arith.addf %121, %124 : vector<2x128xf32>
    %c5_85 = arith.constant 5 : index
    %c2_86 = arith.constant 2 : index
    %126 = memref.load %arg2[%c5_85, %c2_86] : memref<8x4xf32, #tpu.memory_space<smem>>
    %127 = vector.broadcast %126 : f32 to vector<2x128xf32>
    %128 = arith.mulf %5, %127 : vector<2x128xf32>
    %129 = arith.addf %125, %128 : vector<2x128xf32>
    %c5_87 = arith.constant 5 : index
    %c3_88 = arith.constant 3 : index
    %130 = memref.load %arg2[%c5_87, %c3_88] : memref<8x4xf32, #tpu.memory_space<smem>>
    %131 = vector.broadcast %130 : f32 to vector<2x128xf32>
    %132 = arith.mulf %7, %131 : vector<2x128xf32>
    %133 = arith.addf %129, %132 : vector<2x128xf32>
    %c5_89 = arith.constant 5 : index
    %134 = memref.load %arg3[%c5_89] : memref<8xf32, #tpu.memory_space<smem>>
    %135 = vector.broadcast %134 : f32 to vector<2x128xf32>
    %136 = arith.addf %133, %135 : vector<2x128xf32>
    %cst_90 = arith.constant dense<0.000000e+00> : vector<2x512xf32>
    %137 = tpu.matmul %136, %8, %cst_90 {dimension_numbers = #tpu.dot_dimension_numbers<[1], [0], [0], [1], [0, 0, 1, 1], [], []>} : vector<2x128xf32>, vector<128x512xf32>, vector<2x512xf32> -> vector<2x512xf32>
    %c0_91 = arith.constant 0 : index
    %c5_92 = arith.constant 5 : index
    %c0_93 = arith.constant 0 : index
    %c0_94 = arith.constant 0 : index
    %138 = vector.load %arg6[%c0_91, %c5_92, %c0_93, %c0_94] : memref<1x8x2x512xf32, #tpu.memory_space<vmem>>, vector<1x1x2x512xf32>
    %139 = vector.shape_cast %138 : vector<1x1x2x512xf32> to vector<2x512xf32>
    %140 = vector.shape_cast %137 : vector<2x512xf32> to vector<1x1x2x512xf32>
    tpu.vector_store %arg6[%c0_91, %c5_92, %c0_93, %c0_94], %140 {strides = array<i32>} : memref<1x8x2x512xf32, #tpu.memory_space<vmem>>, vector<1x1x2x512xf32>,
    %c6 = arith.constant 6 : index
    %c0_95 = arith.constant 0 : index
    %141 = memref.load %arg2[%c6, %c0_95] : memref<8x4xf32, #tpu.memory_space<smem>>
    %142 = vector.broadcast %141 : f32 to vector<2x128xf32>
    %143 = arith.mulf %1, %142 : vector<2x128xf32>
    %c6_96 = arith.constant 6 : index
    %c1_97 = arith.constant 1 : index
    %144 = memref.load %arg2[%c6_96, %c1_97] : memref<8x4xf32, #tpu.memory_space<smem>>
    %145 = vector.broadcast %144 : f32 to vector<2x128xf32>
    %146 = arith.mulf %3, %145 : vector<2x128xf32>
    %147 = arith.addf %143, %146 : vector<2x128xf32>
    %c6_98 = arith.constant 6 : index
    %c2_99 = arith.constant 2 : index
    %148 = memref.load %arg2[%c6_98, %c2_99] : memref<8x4xf32, #tpu.memory_space<smem>>
    %149 = vector.broadcast %148 : f32 to vector<2x128xf32>
    %150 = arith.mulf %5, %149 : vector<2x128xf32>
    %151 = arith.addf %147, %150 : vector<2x128xf32>
    %c6_100 = arith.constant 6 : index
    %c3_101 = arith.constant 3 : index
    %152 = memref.load %arg2[%c6_100, %c3_101] : memref<8x4xf32, #tpu.memory_space<smem>>
    %153 = vector.broadcast %152 : f32 to vector<2x128xf32>
    %154 = arith.mulf %7, %153 : vector<2x128xf32>
    %155 = arith.addf %151, %154 : vector<2x128xf32>
    %c6_102 = arith.constant 6 : index
    %156 = memref.load %arg3[%c6_102] : memref<8xf32, #tpu.memory_space<smem>>
    %157 = vector.broadcast %156 : f32 to vector<2x128xf32>
    %158 = arith.addf %155, %157 : vector<2x128xf32>
    %cst_103 = arith.constant dense<0.000000e+00> : vector<2x512xf32>
    %159 = tpu.matmul %158, %8, %cst_103 {dimension_numbers = #tpu.dot_dimension_numbers<[1], [0], [0], [1], [0, 0, 1, 1], [], []>} : vector<2x128xf32>, vector<128x512xf32>, vector<2x512xf32> -> vector<2x512xf32>
    %c0_104 = arith.constant 0 : index
    %c6_105 = arith.constant 6 : index
    %c0_106 = arith.constant 0 : index
    %c0_107 = arith.constant 0 : index
    %160 = vector.load %arg6[%c0_104, %c6_105, %c0_106, %c0_107] : memref<1x8x2x512xf32, #tpu.memory_space<vmem>>, vector<1x1x2x512xf32>
    %161 = vector.shape_cast %160 : vector<1x1x2x512xf32> to vector<2x512xf32>
    %162 = vector.shape_cast %159 : vector<2x512xf32> to vector<1x1x2x512xf32>
    tpu.vector_store %arg6[%c0_104, %c6_105, %c0_106, %c0_107], %162 {strides = array<i32>} : memref<1x8x2x512xf32, #tpu.memory_space<vmem>>, vector<1x1x2x512xf32>,
    %c7 = arith.constant 7 : index
    %c0_108 = arith.constant 0 : index
    %163 = memref.load %arg2[%c7, %c0_108] : memref<8x4xf32, #tpu.memory_space<smem>>
    %164 = vector.broadcast %163 : f32 to vector<2x128xf32>
    %165 = arith.mulf %1, %164 : vector<2x128xf32>
    %c7_109 = arith.constant 7 : index
    %c1_110 = arith.constant 1 : index
    %166 = memref.load %arg2[%c7_109, %c1_110] : memref<8x4xf32, #tpu.memory_space<smem>>
    %167 = vector.broadcast %166 : f32 to vector<2x128xf32>
    %168 = arith.mulf %3, %167 : vector<2x128xf32>
    %169 = arith.addf %165, %168 : vector<2x128xf32>
    %c7_111 = arith.constant 7 : index
    %c2_112 = arith.constant 2 : index
    %170 = memref.load %arg2[%c7_111, %c2_112] : memref<8x4xf32, #tpu.memory_space<smem>>
    %171 = vector.broadcast %170 : f32 to vector<2x128xf32>
    %172 = arith.mulf %5, %171 : vector<2x128xf32>
    %173 = arith.addf %169, %172 : vector<2x128xf32>
    %c7_113 = arith.constant 7 : index
    %c3_114 = arith.constant 3 : index
    %174 = memref.load %arg2[%c7_113, %c3_114] : memref<8x4xf32, #tpu.memory_space<smem>>
    %175 = vector.broadcast %174 : f32 to vector<2x128xf32>
    %176 = arith.mulf %7, %175 : vector<2x128xf32>
    %177 = arith.addf %173, %176 : vector<2x128xf32>
    %c7_115 = arith.constant 7 : index
    %178 = memref.load %arg3[%c7_115] : memref<8xf32, #tpu.memory_space<smem>>
    %179 = vector.broadcast %178 : f32 to vector<2x128xf32>
    %180 = arith.addf %177, %179 : vector<2x128xf32>
    %cst_116 = arith.constant dense<0.000000e+00> : vector<2x512xf32>
    %181 = tpu.matmul %180, %8, %cst_116 {dimension_numbers = #tpu.dot_dimension_numbers<[1], [0], [0], [1], [0, 0, 1, 1], [], []>} : vector<2x128xf32>, vector<128x512xf32>, vector<2x512xf32> -> vector<2x512xf32>
    %c0_117 = arith.constant 0 : index
    %c7_118 = arith.constant 7 : index
    %c0_119 = arith.constant 0 : index
    %c0_120 = arith.constant 0 : index
    %182 = vector.load %arg6[%c0_117, %c7_118, %c0_119, %c0_120] : memref<1x8x2x512xf32, #tpu.memory_space<vmem>>, vector<1x1x2x512xf32>
    %183 = vector.shape_cast %182 : vector<1x1x2x512xf32> to vector<2x512xf32>
    %184 = vector.shape_cast %181 : vector<2x512xf32> to vector<1x1x2x512xf32>
    tpu.vector_store %arg6[%c0_117, %c7_118, %c0_119, %c0_120], %184 {strides = array<i32>} : memref<1x8x2x512xf32, #tpu.memory_space<vmem>>, vector<1x1x2x512xf32>,
    return
  }
  func.func @transform_0(%arg0: i32, %arg1: i32) -> (i32, i32) {
    %c0_i32 = arith.constant 0 : i32
    %c0_i32_0 = arith.constant 0 : i32
    %c0_i32_1 = arith.constant 0 : i32
    return %c0_i32, %c0_i32_0 : i32, i32
  }
  func.func @transform_1(%arg0: i32, %arg1: i32) -> i32 {
    %c0_i32 = arith.constant 0 : i32
    %c0_i32_0 = arith.constant 0 : i32
    return %c0_i32 : i32
  }
  func.func @transform_2(%arg0: i32, %arg1: i32) -> (i32, i32, i32, i32) {
    %c0_i32 = arith.constant 0 : i32
    %c0_i32_0 = arith.constant 0 : i32
    %c0_i32_1 = arith.constant 0 : i32
    return %arg0, %c0_i32, %arg1, %c0_i32_0 : i32, i32, i32, i32
  }
  func.func @transform_3(%arg0: i32, %arg1: i32) -> (i32, i32) {
    %c0_i32 = arith.constant 0 : i32
    %c0_i32_0 = arith.constant 0 : i32
    %c0_i32_1 = arith.constant 0 : i32
    return %c0_i32, %c0_i32_0 : i32, i32
  }
  func.func @transform_4(%arg0: i32, %arg1: i32) -> (i32, i32, i32, i32) {
    %c0_i32 = arith.constant 0 : i32
    %c0_i32_0 = arith.constant 0 : i32
    %c0_i32_1 = arith.constant 0 : i32
    return %arg0, %c0_i32, %arg1, %c0_i32_0 : i32, i32, i32, i32
  }
}

</mosaic_0001>

<llo_original>
// kernel: tpu_custom_call.1
$region0: #{tpu_custom_call.1}
  #allocation0 [shape = 'u32[]', space=smem, size = 0x4, offset = 0x4, fixed_abs, tag = 'smem constant byte address 0x4 - core index']
  #allocation1 [shape = 'u32[144,128]{1,0:T(1,128)}', space=vmem, size = 0x12000, scoped, tag = 'internal scratch']
  %s0 = inlined_call_operand.vmem [shape: f32[8,4], index: 0, kind: input, shape index: {}]
  %s1 = inlined_call_operand.vmem [shape: f32[8], index: 1, kind: input, shape index: {}]
  %s2 = inlined_call_operand.vmem [shape: f32[2,4,2,128], index: 2, kind: input, shape index: {}]
  %s3 = inlined_call_operand.hbm [shape: f32[128,512], index: 3, kind: input, shape index: {}]
  %s4 = inlined_call_operand.hbm [shape: f32[2,8,2,512], index: 4, kind: output, shape index: {}]
  %s5 = sld [smem:[#allocation0]]
  $region61: #{tpu_custom_call.1} parent=0
    _
  %s7 = ssub.s32 1, %s5
  %s8 = scalar_select 0, %s7, %s5
  $region1: #{tpu_custom_call.1} parent=0
    #allocation2 [shape = 'u8[4096]{0}', space=smem, size = 0x1000, scoped, tag = 'input window, operand 0, single buffered']
    #allocation3 [shape = 's32[2]{0}', space=sflag, size = 0x8, scoped, tag = 'scoped memory for tpu_custom_call.1']
    #allocation4 [shape = 's32[2]{0}', space=sflag, size = 0x8, scoped, tag = 'scoped memory for tpu_custom_call.1']
    #allocation5 [shape = 's32[2]{0}', space=sflag, size = 0x8, scoped, tag = 'scoped memory for tpu_custom_call.1']
    #allocation6 [shape = 'u8[512]{0}', space=smem, size = 0x200, scoped, tag = 'input window, operand 1, single buffered']
    #allocation7 [shape = 's32[1]{0}', space=sflag, size = 0x4, scoped, tag = 'scoped memory for tpu_custom_call.1']
    #allocation8 [shape = 'u8[262144]{0}', space=vmem, size = 0x40000, scoped, tag = 'input window, operand 3, single buffered']
    #allocation9 [shape = 'u8[65536]{0}', space=vmem, size = 0x10000, scoped, tag = 'output window, operand 0']
    %9 = vsyncpa [#allocation5], 0
    %10 = vsyncpa [#allocation7], 0
    %11 = vsyncpa [#allocation3], 0
    %12 = vsyncpa [#allocation4], 0
    %s13 = scalar_lea.sflag [#allocation4], 1
    %14 = vsyncpa %s13, 0
    loop: start=0, step=1, limit=4
    $region2: #{tpu_custom_call.1} parent=1 // loop_pre_header
      _
    $region3: #{tpu_custom_call.1} parent=1 // loop_header
      %s16 = sphi 0, %s20
      %p17 = scmp.ge.s32.totalorder %s16, 4
      %s23 = sphi 0, %s35
      %s24 = sphi 0, %s31
      %s25 = sphi 0, %s23
      %s26 = sphi 0, %s24
      %s27 = sphi 0, %s25
      %s28 = sphi 0, %s26
      %s36 = sphi 0, %s36
      %s38 = sphi 0, %s36
      %s39 = sphi 0, %s38
      %s53 = sphi 0, %s39
      %s57 = sphi 0, %s57
      %s59 = sphi 0, %s57
      %s60 = sphi 0, %s59
      %s74 = sphi 0, %s60
      %s82 = sphi 0, %s84
      %s85 = sphi 0, %s82
      %s86 = sphi 0, %s85
      %s102 = sphi 0, %s86
      %s106 = sphi 0, %s106
      %s108 = sphi 0, %s106
      %s109 = sphi 0, %s108
      %s123 = sphi 0, %s109
      %s131 = sphi 0, %s133
      %s134 = sphi 0, %s131
      %s135 = sphi 0, %s134
      %s151 = sphi 0, %s135
    $region4: #{tpu_custom_call.1} parent=1 // loop_header_branch
      %19 = sbr.rel (%p17) target = $region8
    $region5: #{tpu_custom_call.1} parent=1 // loop_body
      %s21 = ssub.s32 %s16, 1
      %s22 = ssub.s32 %s16, 2
      %s29 = sadd.s32 1, %s24
      %p30 = scmp.ge.s32.totalorder %s29, 1
      %s31 = scalar_select %p30, 0, %s29
      %s32 = sadd.s32 1, %s23
      %s33 = scalar_select %p30, %s32, %s23
      %p34 = scmp.ge.s32.totalorder %s33, 2
      %s35 = scalar_select %p34, 0, %s33
      %s37 = sadd.s32 %s36, 1
      %p40 = scmp.eq.s32.totalorder %s16, 1
      %p41 = scmp.ne.s32.totalorder %s36, %s38
      %p42 = scmp.eq.s32.totalorder %s16, 0
      %p43 = por %p41, %p42
      %p44 = scmp.ne.s32.totalorder %s36, %s38
      %p45 = scmp.eq.s32.totalorder %s21, 1
      %p46 = por %p44, %p45
      %p47 = scmp.ne.s32.totalorder %s38, %s39
      %p48 = scmp.eq.s32.totalorder %s21, 0
      %p49 = por %p47, %p48
      %p50 = scmp.ne.s32.totalorder %s38, %s39
      %p51 = scmp.eq.s32.totalorder %s22, 1
      %p52 = por %p50, %p51
      %p54 = scmp.ne.s32.totalorder %s39, %s53
      %p55 = scmp.eq.s32.totalorder %s22, 0
      %p56 = por %p54, %p55
      %s58 = sadd.s32 %s57, 1
      %p61 = scmp.eq.s32.totalorder %s16, 1
      %p62 = scmp.ne.s32.totalorder %s57, %s59
      %p63 = scmp.eq.s32.totalorder %s16, 0
      %p64 = por %p62, %p63
      %p65 = scmp.ne.s32.totalorder %s57, %s59
      %p66 = scmp.eq.s32.totalorder %s21, 1
      %p67 = por %p65, %p66
      %p68 = scmp.ne.s32.totalorder %s59, %s60
      %p69 = scmp.eq.s32.totalorder %s21, 0
      %p70 = por %p68, %p69
      %p71 = scmp.ne.s32.totalorder %s59, %s60
      %p72 = scmp.eq.s32.totalorder %s22, 1
      %p73 = por %p71, %p72
      %p75 = scmp.ne.s32.totalorder %s60, %s74
      %p76 = scmp.eq.s32.totalorder %s22, 0
      %p77 = por %p75, %p76
      %s78 = ssub.s32 %s23, %s35
      %s79 = ssub.s32 %s24, %s31
      %s80 = sor.u32 %s78, %s79
      %p81 = scmp.eq.s32.totalorder %s80, 0
      %s83 = sadd.s32 %s82, 1
      %s84 = scalar_select %p81, %s82, %s83
      %p87 = pneg %p81
      %p88 = scmp.eq.s32.totalorder %s16, 1
      %p89 = por %p87, %p88
      %p90 = scmp.ne.s32.totalorder %s82, %s85
      %p91 = scmp.eq.s32.totalorder %s16, 0
      %p92 = por %p90, %p91
      %p93 = scmp.ne.s32.totalorder %s82, %s85
      %p94 = scmp.eq.s32.totalorder %s21, 1
      %p95 = por %p93, %p94
      %p96 = scmp.ne.s32.totalorder %s85, %s86
      %p97 = scmp.eq.s32.totalorder %s21, 0
      %p98 = por %p96, %p97
      %p99 = scmp.ne.s32.totalorder %s85, %s86
      %p100 = scmp.eq.s32.totalorder %s22, 1
      %p101 = por %p99, %p100
      %p103 = scmp.ne.s32.totalorder %s86, %s102
      %p104 = scmp.eq.s32.totalorder %s22, 0
      %p105 = por %p103, %p104
      %s107 = sadd.s32 %s106, 1
      %p110 = scmp.eq.s32.totalorder %s16, 1
      %p111 = scmp.ne.s32.totalorder %s106, %s108
      %p112 = scmp.eq.s32.totalorder %s16, 0
      %p113 = por %p111, %p112
      %p114 = scmp.ne.s32.totalorder %s106, %s108
      %p115 = scmp.eq.s32.totalorder %s21, 1
      %p116 = por %p114, %p115
      %p117 = scmp.ne.s32.totalorder %s108, %s109
      %p118 = scmp.eq.s32.totalorder %s21, 0
      %p119 = por %p117, %p118
      %p120 = scmp.ne.s32.totalorder %s108, %s109
      %p121 = scmp.eq.s32.totalorder %s22, 1
      %p122 = por %p120, %p121
      %p124 = scmp.ne.s32.totalorder %s109, %s123
      %p125 = scmp.eq.s32.totalorder %s22, 0
      %p126 = por %p124, %p125
      %s127 = ssub.s32 %s23, %s35
      %s128 = ssub.s32 %s24, %s31
      %s129 = sor.u32 %s127, %s128
      %p130 = scmp.eq.s32.totalorder %s129, 0
      %s132 = sadd.s32 %s131, 1
      %s133 = scalar_select %p130, %s131, %s132
      %p136 = pneg %p130
      %p137 = scmp.eq.s32.totalorder %s16, 1
      %p138 = por %p136, %p137
      %p139 = scmp.ne.s32.totalorder %s131, %s134
      %p140 = scmp.eq.s32.totalorder %s16, 0
      %p141 = por %p139, %p140
      %p142 = scmp.ne.s32.totalorder %s131, %s134
      %p143 = scmp.eq.s32.totalorder %s21, 1
      %p144 = por %p142, %p143
      %p145 = scmp.ne.s32.totalorder %s134, %s135
      %p146 = scmp.eq.s32.totalorder %s21, 0
      %p147 = por %p145, %p146
      %p148 = scmp.ne.s32.totalorder %s134, %s135
      %p149 = scmp.eq.s32.totalorder %s22, 1
      %p150 = por %p148, %p149
      %p152 = scmp.ne.s32.totalorder %s135, %s151
      %p153 = scmp.eq.s32.totalorder %s22, 0
      %p154 = por %p152, %p153
      %p155 = scmp.le.s32.totalorder 1, %s16
      %p156 = scmp.lt.s32.totalorder %s16, 3
      %p157 = pnand %p155, %p156
      %p158 = pneg %p157
      // Predicated region
      $region9: #{tpu_custom_call.1} parent=5 // pred_check
        _
      $region10: #{tpu_custom_call.1} parent=5 // pred_check_branch
        %160 = sbr.rel (%p157) target = $region12
      $region11: #{tpu_custom_call.1} parent=5 // pred_region
        %s161 = ssub.s32 %s16, 1
        // Predicated region
        $region13: #{tpu_custom_call.1} parent=11 // pred_check
          %p162 = pneg %p49
        $region14: #{tpu_custom_call.1} parent=11 // pred_check_branch
          %164 = sbr.rel (%p162) target = $region16
        $region15: #{tpu_custom_call.1} parent=11 // pred_region
          %s166 = ssub.s32 128, 128
          %167 = vsyncadd [#allocation5], %s166
          %s169 = sshll.u32 %s0, 4
          %s170 = int_to_ptr.vmem [resolvable:$true] %s169
          %172 = dma.vmem_to_smem %s170, 128, [#allocation2], [#allocation5]
        $region16: #{tpu_custom_call.1} parent=11 // pred_fallthru
          _
        // Predicated region
        $region17: #{tpu_custom_call.1} parent=11 // pred_check
          %p173 = pneg %p70
        $region18: #{tpu_custom_call.1} parent=11 // pred_check_branch
          %175 = sbr.rel (%p173) target = $region20
        $region19: #{tpu_custom_call.1} parent=11 // pred_region
          %s177 = ssub.s32 16, 16
          %178 = vsyncadd [#allocation7], %s177
          %s180 = sshll.u32 %s1, 4
          %s181 = int_to_ptr.vmem [resolvable:$true] %s180
          %183 = dma.vmem_to_smem %s181, 16, [#allocation6], [#allocation7]
        $region20: #{tpu_custom_call.1} parent=11 // pred_fallthru
          _
        // Predicated region
        $region21: #{tpu_custom_call.1} parent=11 // pred_check
          %p184 = pneg %p119
        $region22: #{tpu_custom_call.1} parent=11 // pred_check_branch
          %186 = sbr.rel (%p184) target = $region24
        $region23: #{tpu_custom_call.1} parent=11 // pred_region
          %s188 = ssub.s32 8192, 8192
          %189 = vsyncadd [#allocation3], %s188
          %s190 = sshll.u32 [#allocation8], 4
          %s191 = int_to_ptr.vmem [resolvable:$true] %s190
          %196 = dma.hbm_to_vmem [thread:$0]  %s3, 8192, %s191, [#allocation3], 512, 512, 32
        $region24: #{tpu_custom_call.1} parent=11 // pred_fallthru
          _
      $region12: #{tpu_custom_call.1} parent=5 // pred_fallthru
        _
      %p197 = scmp.lt.s32.totalorder %s16, 2
      // Predicated region
      $region25: #{tpu_custom_call.1} parent=5 // pred_check
        %p198 = pneg %p197
      $region26: #{tpu_custom_call.1} parent=5 // pred_check_branch
        %200 = sbr.rel (%p198) target = $region28
      $region27: #{tpu_custom_call.1} parent=5 // pred_region
        // Predicated region
        $region29: #{tpu_custom_call.1} parent=27 // pred_check
          %p201 = pneg %p92
        $region30: #{tpu_custom_call.1} parent=27 // pred_check_branch
          %203 = sbr.rel (%p201) target = $region32
        $region31: #{tpu_custom_call.1} parent=27 // pred_region
          %p204 = scmp.lt.s32.totalorder %s23, 1
          %s205 = scalar_select %p204, %s23, 1
          %p206 = scmp.lt.s32.totalorder %s24, 0
          %s207 = scalar_select %p206, %s24, 0
          %s208 = smul.addr %s205, 4
          %s209 = sadd.s32 %s207, %s208
          %s210 = smul.addr %s209, 2
          %s211 = scalar_lea.vmem %s2, %s210
        $region32: #{tpu_custom_call.1} parent=27 // pred_fallthru
          _
      $region28: #{tpu_custom_call.1} parent=5 // pred_fallthru
        _
      %p212 = scmp.le.s32.totalorder 1, %s16
      %p213 = scmp.lt.s32.totalorder %s16, 3
      %p214 = pnand %p212, %p213
      %p215 = pneg %p214
      // Predicated region
      $region33: #{tpu_custom_call.1} parent=5 // pred_check
        _
      $region34: #{tpu_custom_call.1} parent=5 // pred_check_branch
        %217 = sbr.rel (%p214) target = $region36
      $region35: #{tpu_custom_call.1} parent=5 // pred_region
        %s218 = ssub.s32 %s16, 1
        // Predicated region
        $region37: #{tpu_custom_call.1} parent=35 // pred_check
          %p219 = pneg %p49
        $region38: #{tpu_custom_call.1} parent=35 // pred_check_branch
          %221 = sbr.rel (%p219) target = $region40
        $region39: #{tpu_custom_call.1} parent=35 // pred_region
          %222 = dma.done [#allocation5], 128
        $region40: #{tpu_custom_call.1} parent=35 // pred_fallthru
          _
        // Predicated region
        $region41: #{tpu_custom_call.1} parent=35 // pred_check
          %p223 = pneg %p70
        $region42: #{tpu_custom_call.1} parent=35 // pred_check_branch
          %225 = sbr.rel (%p223) target = $region44
        $region43: #{tpu_custom_call.1} parent=35 // pred_region
          %226 = dma.done [#allocation7], 16
        $region44: #{tpu_custom_call.1} parent=35 // pred_fallthru
          _
        // Predicated region
        $region45: #{tpu_custom_call.1} parent=35 // pred_check
          %p227 = pneg %p119
        $region46: #{tpu_custom_call.1} parent=35 // pred_check_branch
          %229 = sbr.rel (%p227) target = $region48
        $region47: #{tpu_custom_call.1} parent=35 // pred_region
          %230 = dma.done [#allocation3], 8192
        $region48: #{tpu_custom_call.1} parent=35 // pred_fallthru
          _
        %231 = sfence
        %p232 = pneg %p49
        %p233 = pneg %p46
        %p234 = pneg %p70
        %p235 = pneg %p67
        %p236 = scmp.lt.s32.totalorder %s25, 1
        %s237 = scalar_select %p236, %s25, 1
        %p238 = scmp.lt.s32.totalorder %s26, 0
        %s239 = scalar_select %p238, %s26, 0
        %s240 = smul.addr %s237, 4
        %s241 = sadd.s32 %s239, %s240
        %s242 = smul.addr %s241, 2
        %s243 = scalar_lea.vmem %s2, %s242
        %p244 = pneg %p98
        %p245 = pneg %p95
        %p246 = pneg %p119
        %p247 = pneg %p116
        %p248 = pneg %p147
        %p249 = pneg %p144
        %s250 = sand.u32 %s134, 1
        %s251 = scalar_lea.sflag [#allocation4], %s250
        %s252 = sand.u32 %s134, 1
        %s253 = smul.addr %s252, 64
        %s254 = scalar_lea.vmem [#allocation9], %s253
        %p255 = scmp.lt.s32.totalorder %s25, 1
        %s256 = scalar_select %p255, %s25, 1
        %p257 = scmp.lt.s32.totalorder %s26, 0
        %s258 = scalar_select %p257, %s26, 0
        %s259 = smul.addr %s256, 4
        %s260 = sadd.s32 %s258, %s259
        %s261 = smul.addr %s260, 2
        %s262 = scalar_lea.vmem %s2, %s261
        %v263 = vld [vmem:[%s262] sm:$0x3]
        %s264 = scalar_lea.vmem %s262, 2
        %v265 = vld [vmem:[%s264] sm:$0x3]
        %s266 = scalar_lea.vmem %s262, 4
        %v267 = vld [vmem:[%s266] sm:$0x3]
        %s268 = scalar_lea.vmem %s262, 6
        %v269 = vld [vmem:[%s268] sm:$0x3]
        %v270 = vld [vmem:[#allocation8] sm:$0xff]
        %v271 = vld [vmem:[#allocation8 + $0x8] sm:$0xff]
        %v272 = vld [vmem:[#allocation8 + $0x10] sm:$0xff]
        %v273 = vld [vmem:[#allocation8 + $0x18] sm:$0xff]
        %v274 = vld [vmem:[#allocation8 + $0x20] sm:$0xff]
        %v275 = vld [vmem:[#allocation8 + $0x28] sm:$0xff]
        %v276 = vld [vmem:[#allocation8 + $0x30] sm:$0xff]
        %v277 = vld [vmem:[#allocation8 + $0x38] sm:$0xff]
        %v278 = vld [vmem:[#allocation8 + $0x40] sm:$0xff]
        %v279 = vld [vmem:[#allocation8 + $0x48] sm:$0xff]
        %v280 = vld [vmem:[#allocation8 + $0x50] sm:$0xff]
        %v281 = vld [vmem:[#allocation8 + $0x58] sm:$0xff]
        %v282 = vld [vmem:[#allocation8 + $0x60] sm:$0xff]
        %v283 = vld [vmem:[#allocation8 + $0x68] sm:$0xff]
        %v284 = vld [vmem:[#allocation8 + $0x70] sm:$0xff]
        %v285 = vld [vmem:[#allocation8 + $0x78] sm:$0xff]
        %v286 = vld [vmem:[#allocation8 + $0x80] sm:$0xff]
        %v287 = vld [vmem:[#allocation8 + $0x88] sm:$0xff]
        %v288 = vld [vmem:[#allocation8 + $0x90] sm:$0xff]
        %v289 = vld [vmem:[#allocation8 + $0x98] sm:$0xff]
        %v290 = vld [vmem:[#allocation8 + $0xa0] sm:$0xff]
        %v291 = vld [vmem:[#allocation8 + $0xa8] sm:$0xff]
        %v292 = vld [vmem:[#allocation8 + $0xb0] sm:$0xff]
        %v293 = vld [vmem:[#allocation8 + $0xb8] sm:$0xff]
        %v294 = vld [vmem:[#allocation8 + $0xc0] sm:$0xff]
        %v295 = vld [vmem:[#allocation8 + $0xc8] sm:$0xff]
        %v296 = vld [vmem:[#allocation8 + $0xd0] sm:$0xff]
        %v297 = vld [vmem:[#allocation8 + $0xd8] sm:$0xff]
        %v298 = vld [vmem:[#allocation8 + $0xe0] sm:$0xff]
        %v299 = vld [vmem:[#allocation8 + $0xe8] sm:$0xff]
        %v300 = vld [vmem:[#allocation8 + $0xf0] sm:$0xff]
        %v301 = vld [vmem:[#allocation8 + $0xf8] sm:$0xff]
        %v302 = vld [vmem:[#allocation8 + $0x100] sm:$0xff]
        %v303 = vld [vmem:[#allocation8 + $0x108] sm:$0xff]
        %v304 = vld [vmem:[#allocation8 + $0x110] sm:$0xff]
        %v305 = vld [vmem:[#allocation8 + $0x118] sm:$0xff]
        %v306 = vld [vmem:[#allocation8 + $0x120] sm:$0xff]
        %v307 = vld [vmem:[#allocation8 + $0x128] sm:$0xff]
        %v308 = vld [vmem:[#allocation8 + $0x130] sm:$0xff]
        %v309 = vld [vmem:[#allocation8 + $0x138] sm:$0xff]
        %v310 = vld [vmem:[#allocation8 + $0x140] sm:$0xff]
        %v311 = vld [vmem:[#allocation8 + $0x148] sm:$0xff]
        %v312 = vld [vmem:[#allocation8 + $0x150] sm:$0xff]
        %v313 = vld [vmem:[#allocation8 + $0x158] sm:$0xff]
        %v314 = vld [vmem:[#allocation8 + $0x160] sm:$0xff]
        %v315 = vld [vmem:[#allocation8 + $0x168] sm:$0xff]
        %v316 = vld [vmem:[#allocation8 + $0x170] sm:$0xff]
        %v317 = vld [vmem:[#allocation8 + $0x178] sm:$0xff]
        %v318 = vld [vmem:[#allocation8 + $0x180] sm:$0xff]
        %v319 = vld [vmem:[#allocation8 + $0x188] sm:$0xff]
        %v320 = vld [vmem:[#allocation8 + $0x190] sm:$0xff]
        %v321 = vld [vmem:[#allocation8 + $0x198] sm:$0xff]
        %v322 = vld [vmem:[#allocation8 + $0x1a0] sm:$0xff]
        %v323 = vld [vmem:[#allocation8 + $0x1a8] sm:$0xff]
        %v324 = vld [vmem:[#allocation8 + $0x1b0] sm:$0xff]
        %v325 = vld [vmem:[#allocation8 + $0x1b8] sm:$0xff]
        %v326 = vld [vmem:[#allocation8 + $0x1c0] sm:$0xff]
        %v327 = vld [vmem:[#allocation8 + $0x1c8] sm:$0xff]
        %v328 = vld [vmem:[#allocation8 + $0x1d0] sm:$0xff]
        %v329 = vld [vmem:[#allocation8 + $0x1d8] sm:$0xff]
        %v330 = vld [vmem:[#allocation8 + $0x1e0] sm:$0xff]
        %v331 = vld [vmem:[#allocation8 + $0x1e8] sm:$0xff]
        %v332 = vld [vmem:[#allocation8 + $0x1f0] sm:$0xff]
        %v333 = vld [vmem:[#allocation8 + $0x1f8] sm:$0xff]
        %s334 = sld [smem:[#allocation2]]
        %v335 = vstv %s334
        %v336 = vmul.f32 %v263, %v335
        %s337 = sld [smem:[#allocation2 + $0x1]]
        %v338 = vstv %s337
        %v339 = vmul.f32 %v265, %v338
        %v340 = vadd.f32 %v336, %v339
        %s341 = sld [smem:[#allocation2 + $0x2]]
        %v342 = vstv %s341
        %v343 = vmul.f32 %v267, %v342
        %v344 = vadd.f32 %v340, %v343
        %s345 = sld [smem:[#allocation2 + $0x3]]
        %v346 = vstv %s345
        %v347 = vmul.f32 %v269, %v346
        %v348 = vadd.f32 %v344, %v347
        %s349 = sld [smem:[#allocation6]]
        %v350 = vstv %s349
        %v351 = vadd.f32 %v348, %v350
        %352 = vmatprep.subr.mxu0 %v271
        %353 = vmatpush1.msra.mxu0 %v270
        %354 = vmatprep.subr.mxu0 %v275
        %355 = vmatpush1.msra.mxu0 %v274
        %356 = vmatprep.subr.mxu0 %v279
        %357 = vmatpush1.msra.mxu0 %v278
        %358 = vmatprep.subr.mxu0 %v283
        %359 = vmatpush1.msra.mxu0 %v282
        %360 = vmatprep.subr.mxu0 %v287
        %361 = vmatpush1.msra.mxu0 %v286
        %362 = vmatprep.subr.mxu0 %v291
        %363 = vmatpush1.msra.mxu0 %v290
        %364 = vmatprep.subr.mxu0 %v295
        %365 = vmatpush1.msra.mxu0 %v294
        %366 = vmatprep.subr.mxu0 %v299
        %367 = vmatpush1.msra.mxu0 %v298
        %368 = vmatprep.subr.mxu0 %v303
        %369 = vmatpush1.msra.mxu0 %v302
        %370 = vmatprep.subr.mxu0 %v307
        %371 = vmatpush1.msra.mxu0 %v306
        %372 = vmatprep.subr.mxu0 %v311
        %373 = vmatpush1.msra.mxu0 %v310
        %374 = vmatprep.subr.mxu0 %v315
        %375 = vmatpush1.msra.mxu0 %v314
        %376 = vmatprep.subr.mxu0 %v319
        %377 = vmatpush1.msra.mxu0 %v318
        %378 = vmatprep.subr.mxu0 %v323
        %379 = vmatpush1.msra.mxu0 %v322
        %380 = vmatprep.subr.mxu0 %v327
        %381 = vmatpush1.msra.mxu0 %v326
        %382 = vmatprep.subr.mxu0 %v331
        %383 = vmatpush1.msra.mxu0 %v330
        %384 = vmatprep.subr.mxu0 0.0
        %385 = vmatpush1.msra.mxu0 0.0
        %386 = vmatprep.subr.mxu0 0.0
        %387 = vmatpush1.msra.mxu0 0.0
        %388 = vmatprep.subr.mxu0 0.0
        %389 = vmatpush1.msra.mxu0 0.0
        %390 = vmatprep.subr.mxu0 0.0
        %391 = vmatpush1.msra.mxu0 0.0
        %392 = vmatprep.subr.mxu0 0.0
        %393 = vmatpush1.msra.mxu0 0.0
        %394 = vmatprep.subr.mxu0 0.0
        %395 = vmatpush1.msra.mxu0 0.0
        %396 = vmatprep.subr.mxu0 0.0
        %397 = vmatpush1.msra.mxu0 0.0
        %398 = vmatprep.subr.mxu0 0.0
        %399 = vmatpush1.msra.mxu0 0.0
        %400 = vmatprep.subr.mxu0 0.0
        %401 = vmatpush1.msra.mxu0 0.0
        %402 = vmatprep.subr.mxu0 0.0
        %403 = vmatpush1.msra.mxu0 0.0
        %404 = vmatprep.subr.mxu0 0.0
        %405 = vmatpush1.msra.mxu0 0.0
        %406 = vmatprep.subr.mxu0 0.0
        %407 = vmatpush1.msra.mxu0 0.0
        %408 = vmatprep.subr.mxu0 0.0
        %409 = vmatpush1.msra.mxu0 0.0
        %410 = vmatprep.subr.mxu0 0.0
        %411 = vmatpush1.msra.mxu0 0.0
        %412 = vmatprep.subr.mxu0 0.0
        %413 = vmatpush1.msra.mxu0 0.0
        %414 = vmatprep.subr.mxu0 0.0
        %415 = vmatpush1.msra.mxu0 0.0
        %416 = vmatprep.mubr.f32.mxu0 0.0
        %417 = vmatmul.mubr.f32.gmra.mrb[0].mxu0 %v351
        %v418 = vpop.f32.mrb[0].mxu0
        %v419 = vadd.f32 0.0, %v418
        %v420 = vpop.f32.mrb[0].mxu0
        %v421 = vadd.f32 0.0, %v420
        %422 = vdwg.mxu0
        %423 = vmatprep.subr.mxu0 %v273
        %424 = vmatpush1.msra.mxu0 %v272
        %425 = vmatprep.subr.mxu0 %v277
        %426 = vmatpush1.msra.mxu0 %v276
        %427 = vmatprep.subr.mxu0 %v281
        %428 = vmatpush1.msra.mxu0 %v280
        %429 = vmatprep.subr.mxu0 %v285
        %430 = vmatpush1.msra.mxu0 %v284
        %431 = vmatprep.subr.mxu0 %v289
        %432 = vmatpush1.msra.mxu0 %v288
        %433 = vmatprep.subr.mxu0 %v293
        %434 = vmatpush1.msra.mxu0 %v292
        %435 = vmatprep.subr.mxu0 %v297
        %436 = vmatpush1.msra.mxu0 %v296
        %437 = vmatprep.subr.mxu0 %v301
        %438 = vmatpush1.msra.mxu0 %v300
        %439 = vmatprep.subr.mxu0 %v305
        %440 = vmatpush1.msra.mxu0 %v304
        %441 = vmatprep.subr.mxu0 %v309
        %442 = vmatpush1.msra.mxu0 %v308
        %443 = vmatprep.subr.mxu0 %v313
        %444 = vmatpush1.msra.mxu0 %v312
        %445 = vmatprep.subr.mxu0 %v317
        %446 = vmatpush1.msra.mxu0 %v316
        %447 = vmatprep.subr.mxu0 %v321
        %448 = vmatpush1.msra.mxu0 %v320
        %449 = vmatprep.subr.mxu0 %v325
        %450 = vmatpush1.msra.mxu0 %v324
        %451 = vmatprep.subr.mxu0 %v329
        %452 = vmatpush1.msra.mxu0 %v328
        %453 = vmatprep.subr.mxu0 %v333
        %454 = vmatpush1.msra.mxu0 %v332
        %455 = vmatprep.subr.mxu0 0.0
        %456 = vmatpush1.msra.mxu0 0.0
        %457 = vmatprep.subr.mxu0 0.0
        %458 = vmatpush1.msra.mxu0 0.0
        %459 = vmatprep.subr.mxu0 0.0
        %460 = vmatpush1.msra.mxu0 0.0
        %461 = vmatprep.subr.mxu0 0.0
        %462 = vmatpush1.msra.mxu0 0.0
        %463 = vmatprep.subr.mxu0 0.0
        %464 = vmatpush1.msra.mxu0 0.0
        %465 = vmatprep.subr.mxu0 0.0
        %466 = vmatpush1.msra.mxu0 0.0
        %467 = vmatprep.subr.mxu0 0.0
        %468 = vmatpush1.msra.mxu0 0.0
        %469 = vmatprep.subr.mxu0 0.0
        %470 = vmatpush1.msra.mxu0 0.0
        %471 = vmatprep.subr.mxu0 0.0
        %472 = vmatpush1.msra.mxu0 0.0
        %473 = vmatprep.subr.mxu0 0.0
        %474 = vmatpush1.msra.mxu0 0.0
        %475 = vmatprep.subr.mxu0 0.0
        %476 = vmatpush1.msra.mxu0 0.0
        %477 = vmatprep.subr.mxu0 0.0
        %478 = vmatpush1.msra.mxu0 0.0
        %479 = vmatprep.subr.mxu0 0.0
        %480 = vmatpush1.msra.mxu0 0.0
        %481 = vmatprep.subr.mxu0 0.0
        %482 = vmatpush1.msra.mxu0 0.0
        %483 = vmatprep.subr.mxu0 0.0
        %484 = vmatpush1.msra.mxu0 0.0
        %485 = vmatprep.subr.mxu0 0.0
        %486 = vmatpush1.msra.mxu0 0.0
        %487 = vmatprep.mubr.f32.mxu0 0.0
        %488 = vmatmul.mubr.f32.gmra.mrb[0].mxu0 %v351
        %v489 = vpop.f32.mrb[0].mxu0
        %v490 = vadd.f32 0.0, %v489
        %v491 = vpop.f32.mrb[0].mxu0
        %v492 = vadd.f32 0.0, %v491
        %493 = vdwg.mxu0
        %v498 = vcombine.low %v419, %v421
        %v499 = vcombine.low %v490, %v492
        %v501 = vunpack.c.l.s4 1983009808
        %v502 = vunpack.c.0.s8 %v501
        %v503 = vlaneseq
        %v504 = vshrl.u32 %v503, 7
        %v505 = vsub.s32 %v502, %v504
        %v506 = vrot.slane %v498, %v505
        %v508 = vunpack.c.l.s4 1983009808
        %v509 = vunpack.c.0.s8 %v508
        %v510 = vlaneseq
        %v511 = vshrl.u32 %v510, 7
        %v512 = vsub.s32 %v509, %v511
        %v513 = vrot.slane %v499, %v512
        %v514 = vcombine.low %v506, %v513
        %516 = vst [vmem:[%s254] sm:$0xff] %v514
        %s517 = sld [smem:[#allocation2 + $0x80]]
        %v518 = vstv %s517
        %v519 = vmul.f32 %v263, %v518
        %s520 = sld [smem:[#allocation2 + $0x81]]
        %v521 = vstv %s520
        %v522 = vmul.f32 %v265, %v521
        %v523 = vadd.f32 %v519, %v522
        %s524 = sld [smem:[#allocation2 + $0x82]]
        %v525 = vstv %s524
        %v526 = vmul.f32 %v267, %v525
        %v527 = vadd.f32 %v523, %v526
        %s528 = sld [smem:[#allocation2 + $0x83]]
        %v529 = vstv %s528
        %v530 = vmul.f32 %v269, %v529
        %v531 = vadd.f32 %v527, %v530
        %s532 = sld [smem:[#allocation6 + $0x1]]
        %v533 = vstv %s532
        %v534 = vadd.f32 %v531, %v533
        %535 = vmatprep.subr.mxu0 %v271
        %536 = vmatpush1.msra.mxu0 %v270
        %537 = vmatprep.subr.mxu0 %v275
        %538 = vmatpush1.msra.mxu0 %v274
        %539 = vmatprep.subr.mxu0 %v279
        %540 = vmatpush1.msra.mxu0 %v278
        %541 = vmatprep.subr.mxu0 %v283
        %542 = vmatpush1.msra.mxu0 %v282
        %543 = vmatprep.subr.mxu0 %v287
        %544 = vmatpush1.msra.mxu0 %v286
        %545 = vmatprep.subr.mxu0 %v291
        %546 = vmatpush1.msra.mxu0 %v290
        %547 = vmatprep.subr.mxu0 %v295
        %548 = vmatpush1.msra.mxu0 %v294
        %549 = vmatprep.subr.mxu0 %v299
        %550 = vmatpush1.msra.mxu0 %v298
        %551 = vmatprep.subr.mxu0 %v303
        %552 = vmatpush1.msra.mxu0 %v302
        %553 = vmatprep.subr.mxu0 %v307
        %554 = vmatpush1.msra.mxu0 %v306
        %555 = vmatprep.subr.mxu0 %v311
        %556 = vmatpush1.msra.mxu0 %v310
        %557 = vmatprep.subr.mxu0 %v315
        %558 = vmatpush1.msra.mxu0 %v314
        %559 = vmatprep.subr.mxu0 %v319
        %560 = vmatpush1.msra.mxu0 %v318
        %561 = vmatprep.subr.mxu0 %v323
        %562 = vmatpush1.msra.mxu0 %v322
        %563 = vmatprep.subr.mxu0 %v327
        %564 = vmatpush1.msra.mxu0 %v326
        %565 = vmatprep.subr.mxu0 %v331
        %566 = vmatpush1.msra.mxu0 %v330
        %567 = vmatprep.subr.mxu0 0.0
        %568 = vmatpush1.msra.mxu0 0.0
        %569 = vmatprep.subr.mxu0 0.0
        %570 = vmatpush1.msra.mxu0 0.0
        %571 = vmatprep.subr.mxu0 0.0
        %572 = vmatpush1.msra.mxu0 0.0
        %573 = vmatprep.subr.mxu0 0.0
        %574 = vmatpush1.msra.mxu0 0.0
        %575 = vmatprep.subr.mxu0 0.0
        %576 = vmatpush1.msra.mxu0 0.0
        %577 = vmatprep.subr.mxu0 0.0
        %578 = vmatpush1.msra.mxu0 0.0
        %579 = vmatprep.subr.mxu0 0.0
        %580 = vmatpush1.msra.mxu0 0.0
        %581 = vmatprep.subr.mxu0 0.0
        %582 = vmatpush1.msra.mxu0 0.0
        %583 = vmatprep.subr.mxu0 0.0
        %584 = vmatpush1.msra.mxu0 0.0
        %585 = vmatprep.subr.mxu0 0.0
        %586 = vmatpush1.msra.mxu0 0.0
        %587 = vmatprep.subr.mxu0 0.0
        %588 = vmatpush1.msra.mxu0 0.0
        %589 = vmatprep.subr.mxu0 0.0
        %590 = vmatpush1.msra.mxu0 0.0
        %591 = vmatprep.subr.mxu0 0.0
        %592 = vmatpush1.msra.mxu0 0.0
        %593 = vmatprep.subr.mxu0 0.0
        %594 = vmatpush1.msra.mxu0 0.0
        %595 = vmatprep.subr.mxu0 0.0
        %596 = vmatpush1.msra.mxu0 0.0
        %597 = vmatprep.subr.mxu0 0.0
        %598 = vmatpush1.msra.mxu0 0.0
        %599 = vmatprep.mubr.f32.mxu0 0.0
        %600 = vmatmul.mubr.f32.gmra.mrb[0].mxu0 %v534
        %v601 = vpop.f32.mrb[0].mxu0
        %v602 = vadd.f32 0.0, %v601
        %v603 = vpop.f32.mrb[0].mxu0
        %v604 = vadd.f32 0.0, %v603
        %605 = vdwg.mxu0
        %606 = vmatprep.subr.mxu0 %v273
        %607 = vmatpush1.msra.mxu0 %v272
        %608 = vmatprep.subr.mxu0 %v277
        %609 = vmatpush1.msra.mxu0 %v276
        %610 = vmatprep.subr.mxu0 %v281
        %611 = vmatpush1.msra.mxu0 %v280
        %612 = vmatprep.subr.mxu0 %v285
        %613 = vmatpush1.msra.mxu0 %v284
        %614 = vmatprep.subr.mxu0 %v289
        %615 = vmatpush1.msra.mxu0 %v288
        %616 = vmatprep.subr.mxu0 %v293
        %617 = vmatpush1.msra.mxu0 %v292
        %618 = vmatprep.subr.mxu0 %v297
        %619 = vmatpush1.msra.mxu0 %v296
        %620 = vmatprep.subr.mxu0 %v301
        %621 = vmatpush1.msra.mxu0 %v300
        %622 = vmatprep.subr.mxu0 %v305
        %623 = vmatpush1.msra.mxu0 %v304
        %624 = vmatprep.subr.mxu0 %v309
        %625 = vmatpush1.msra.mxu0 %v308
        %626 = vmatprep.subr.mxu0 %v313
        %627 = vmatpush1.msra.mxu0 %v312
        %628 = vmatprep.subr.mxu0 %v317
        %629 = vmatpush1.msra.mxu0 %v316
        %630 = vmatprep.subr.mxu0 %v321
        %631 = vmatpush1.msra.mxu0 %v320
        %632 = vmatprep.subr.mxu0 %v325
        %633 = vmatpush1.msra.mxu0 %v324
        %634 = vmatprep.subr.mxu0 %v329
        %635 = vmatpush1.msra.mxu0 %v328
        %636 = vmatprep.subr.mxu0 %v333
        %637 = vmatpush1.msra.mxu0 %v332
        %638 = vmatprep.subr.mxu0 0.0
        %639 = vmatpush1.msra.mxu0 0.0
        %640 = vmatprep.subr.mxu0 0.0
        %641 = vmatpush1.msra.mxu0 0.0
        %642 = vmatprep.subr.mxu0 0.0
        %643 = vmatpush1.msra.mxu0 0.0
        %644 = vmatprep.subr.mxu0 0.0
        %645 = vmatpush1.msra.mxu0 0.0
        %646 = vmatprep.subr.mxu0 0.0
        %647 = vmatpush1.msra.mxu0 0.0
        %648 = vmatprep.subr.mxu0 0.0
        %649 = vmatpush1.msra.mxu0 0.0
        %650 = vmatprep.subr.mxu0 0.0
        %651 = vmatpush1.msra.mxu0 0.0
        %652 = vmatprep.subr.mxu0 0.0
        %653 = vmatpush1.msra.mxu0 0.0
        %654 = vmatprep.subr.mxu0 0.0
        %655 = vmatpush1.msra.mxu0 0.0
        %656 = vmatprep.subr.mxu0 0.0
        %657 = vmatpush1.msra.mxu0 0.0
        %658 = vmatprep.subr.mxu0 0.0
        %659 = vmatpush1.msra.mxu0 0.0
        %660 = vmatprep.subr.mxu0 0.0
        %661 = vmatpush1.msra.mxu0 0.0
        %662 = vmatprep.subr.mxu0 0.0
        %663 = vmatpush1.msra.mxu0 0.0
        %664 = vmatprep.subr.mxu0 0.0
        %665 = vmatpush1.msra.mxu0 0.0
        %666 = vmatprep.subr.mxu0 0.0
        %667 = vmatpush1.msra.mxu0 0.0
        %668 = vmatprep.subr.mxu0 0.0
        %669 = vmatpush1.msra.mxu0 0.0
        %670 = vmatprep.mubr.f32.mxu0 0.0
        %671 = vmatmul.mubr.f32.gmra.mrb[0].mxu0 %v534
        %v672 = vpop.f32.mrb[0].mxu0
        %v673 = vadd.f32 0.0, %v672
        %v674 = vpop.f32.mrb[0].mxu0
        %v675 = vadd.f32 0.0, %v674
        %676 = vdwg.mxu0
        %v681 = vcombine.low %v602, %v604
        %v682 = vcombine.low %v673, %v675
        %v684 = vunpack.c.l.s4 1983009808
        %v685 = vunpack.c.0.s8 %v684
        %v686 = vlaneseq
        %v687 = vshrl.u32 %v686, 7
        %v688 = vsub.s32 %v685, %v687
        %v689 = vrot.slane %v681, %v688
        %v691 = vunpack.c.l.s4 1983009808
        %v692 = vunpack.c.0.s8 %v691
        %v693 = vlaneseq
        %v694 = vshrl.u32 %v693, 7
        %v695 = vsub.s32 %v692, %v694
        %v696 = vrot.slane %v682, %v695
        %v697 = vcombine.low %v689, %v696
        %s699 = scalar_lea.vmem %s254, 8 [#allocation9]
        %700 = vst [vmem:[%s699] sm:$0xff] %v697
        %s701 = sld [smem:[#allocation2 + $0x100]]
        %v702 = vstv %s701
        %v703 = vmul.f32 %v263, %v702
        %s704 = sld [smem:[#allocation2 + $0x101]]
        %v705 = vstv %s704
        %v706 = vmul.f32 %v265, %v705
        %v707 = vadd.f32 %v703, %v706
        %s708 = sld [smem:[#allocation2 + $0x102]]
        %v709 = vstv %s708
        %v710 = vmul.f32 %v267, %v709
        %v711 = vadd.f32 %v707, %v710
        %s712 = sld [smem:[#allocation2 + $0x103]]
        %v713 = vstv %s712
        %v714 = vmul.f32 %v269, %v713
        %v715 = vadd.f32 %v711, %v714
        %s716 = sld [smem:[#allocation6 + $0x2]]
        %v717 = vstv %s716
        %v718 = vadd.f32 %v715, %v717
        %719 = vmatprep.subr.mxu0 %v271
        %720 = vmatpush1.msra.mxu0 %v270
        %721 = vmatprep.subr.mxu0 %v275
        %722 = vmatpush1.msra.mxu0 %v274
        %723 = vmatprep.subr.mxu0 %v279
        %724 = vmatpush1.msra.mxu0 %v278
        %725 = vmatprep.subr.mxu0 %v283
        %726 = vmatpush1.msra.mxu0 %v282
        %727 = vmatprep.subr.mxu0 %v287
        %728 = vmatpush1.msra.mxu0 %v286
        %729 = vmatprep.subr.mxu0 %v291
        %730 = vmatpush1.msra.mxu0 %v290
        %731 = vmatprep.subr.mxu0 %v295
        %732 = vmatpush1.msra.mxu0 %v294
        %733 = vmatprep.subr.mxu0 %v299
        %734 = vmatpush1.msra.mxu0 %v298
        %735 = vmatprep.subr.mxu0 %v303
        %736 = vmatpush1.msra.mxu0 %v302
        %737 = vmatprep.subr.mxu0 %v307
        %738 = vmatpush1.msra.mxu0 %v306
        %739 = vmatprep.subr.mxu0 %v311
        %740 = vmatpush1.msra.mxu0 %v310
        %741 = vmatprep.subr.mxu0 %v315
        %742 = vmatpush1.msra.mxu0 %v314
        %743 = vmatprep.subr.mxu0 %v319
        %744 = vmatpush1.msra.mxu0 %v318
        %745 = vmatprep.subr.mxu0 %v323
        %746 = vmatpush1.msra.mxu0 %v322
        %747 = vmatprep.subr.mxu0 %v327
        %748 = vmatpush1.msra.mxu0 %v326
        %749 = vmatprep.subr.mxu0 %v331
        %750 = vmatpush1.msra.mxu0 %v330
        %751 = vmatprep.subr.mxu0 0.0
        %752 = vmatpush1.msra.mxu0 0.0
        %753 = vmatprep.subr.mxu0 0.0
        %754 = vmatpush1.msra.mxu0 0.0
        %755 = vmatprep.subr.mxu0 0.0
        %756 = vmatpush1.msra.mxu0 0.0
        %757 = vmatprep.subr.mxu0 0.0
        %758 = vmatpush1.msra.mxu0 0.0
        %759 = vmatprep.subr.mxu0 0.0
        %760 = vmatpush1.msra.mxu0 0.0
        %761 = vmatprep.subr.mxu0 0.0
        %762 = vmatpush1.msra.mxu0 0.0
        %763 = vmatprep.subr.mxu0 0.0
        %764 = vmatpush1.msra.mxu0 0.0
        %765 = vmatprep.subr.mxu0 0.0
        %766 = vmatpush1.msra.mxu0 0.0
        %767 = vmatprep.subr.mxu0 0.0
        %768 = vmatpush1.msra.mxu0 0.0
        %769 = vmatprep.subr.mxu0 0.0
        %770 = vmatpush1.msra.mxu0 0.0
        %771 = vmatprep.subr.mxu0 0.0
        %772 = vmatpush1.msra.mxu0 0.0
        %773 = vmatprep.subr.mxu0 0.0
        %774 = vmatpush1.msra.mxu0 0.0
        %775 = vmatprep.subr.mxu0 0.0
        %776 = vmatpush1.msra.mxu0 0.0
        %777 = vmatprep.subr.mxu0 0.0
        %778 = vmatpush1.msra.mxu0 0.0
        %779 = vmatprep.subr.mxu0 0.0
        %780 = vmatpush1.msra.mxu0 0.0
        %781 = vmatprep.subr.mxu0 0.0
        %782 = vmatpush1.msra.mxu0 0.0
        %783 = vmatprep.mubr.f32.mxu0 0.0
        %784 = vmatmul.mubr.f32.gmra.mrb[0].mxu0 %v718
        %v785 = vpop.f32.mrb[0].mxu0
        %v786 = vadd.f32 0.0, %v785
        %v787 = vpop.f32.mrb[0].mxu0
        %v788 = vadd.f32 0.0, %v787
        %789 = vdwg.mxu0
        %790 = vmatprep.subr.mxu0 %v273
        %791 = vmatpush1.msra.mxu0 %v272
        %792 = vmatprep.subr.mxu0 %v277
        %793 = vmatpush1.msra.mxu0 %v276
        %794 = vmatprep.subr.mxu0 %v281
        %795 = vmatpush1.msra.mxu0 %v280
        %796 = vmatprep.subr.mxu0 %v285
        %797 = vmatpush1.msra.mxu0 %v284
        %798 = vmatprep.subr.mxu0 %v289
        %799 = vmatpush1.msra.mxu0 %v288
        %800 = vmatprep.subr.mxu0 %v293
        %801 = vmatpush1.msra.mxu0 %v292
        %802 = vmatprep.subr.mxu0 %v297
        %803 = vmatpush1.msra.mxu0 %v296
        %804 = vmatprep.subr.mxu0 %v301
        %805 = vmatpush1.msra.mxu0 %v300
        %806 = vmatprep.subr.mxu0 %v305
        %807 = vmatpush1.msra.mxu0 %v304
        %808 = vmatprep.subr.mxu0 %v309
        %809 = vmatpush1.msra.mxu0 %v308
        %810 = vmatprep.subr.mxu0 %v313
        %811 = vmatpush1.msra.mxu0 %v312
        %812 = vmatprep.subr.mxu0 %v317
        %813 = vmatpush1.msra.mxu0 %v316
        %814 = vmatprep.subr.mxu0 %v321
        %815 = vmatpush1.msra.mxu0 %v320
        %816 = vmatprep.subr.mxu0 %v325
        %817 = vmatpush1.msra.mxu0 %v324
        %818 = vmatprep.subr.mxu0 %v329
        %819 = vmatpush1.msra.mxu0 %v328
        %820 = vmatprep.subr.mxu0 %v333
        %821 = vmatpush1.msra.mxu0 %v332
        %822 = vmatprep.subr.mxu0 0.0
        %823 = vmatpush1.msra.mxu0 0.0
        %824 = vmatprep.subr.mxu0 0.0
        %825 = vmatpush1.msra.mxu0 0.0
        %826 = vmatprep.subr.mxu0 0.0
        %827 = vmatpush1.msra.mxu0 0.0
        %828 = vmatprep.subr.mxu0 0.0
        %829 = vmatpush1.msra.mxu0 0.0
        %830 = vmatprep.subr.mxu0 0.0
        %831 = vmatpush1.msra.mxu0 0.0
        %832 = vmatprep.subr.mxu0 0.0
        %833 = vmatpush1.msra.mxu0 0.0
        %834 = vmatprep.subr.mxu0 0.0
        %835 = vmatpush1.msra.mxu0 0.0
        %836 = vmatprep.subr.mxu0 0.0
        %837 = vmatpush1.msra.mxu0 0.0
        %838 = vmatprep.subr.mxu0 0.0
        %839 = vmatpush1.msra.mxu0 0.0
        %840 = vmatprep.subr.mxu0 0.0
        %841 = vmatpush1.msra.mxu0 0.0
        %842 = vmatprep.subr.mxu0 0.0
        %843 = vmatpush1.msra.mxu0 0.0
        %844 = vmatprep.subr.mxu0 0.0
        %845 = vmatpush1.msra.mxu0 0.0
        %846 = vmatprep.subr.mxu0 0.0
        %847 = vmatpush1.msra.mxu0 0.0
        %848 = vmatprep.subr.mxu0 0.0
        %849 = vmatpush1.msra.mxu0 0.0
        %850 = vmatprep.subr.mxu0 0.0
        %851 = vmatpush1.msra.mxu0 0.0
        %852 = vmatprep.subr.mxu0 0.0
        %853 = vmatpush1.msra.mxu0 0.0
        %854 = vmatprep.mubr.f32.mxu0 0.0
        %855 = vmatmul.mubr.f32.gmra.mrb[0].mxu0 %v718
        %v856 = vpop.f32.mrb[0].mxu0
        %v857 = vadd.f32 0.0, %v856
        %v858 = vpop.f32.mrb[0].mxu0
        %v859 = vadd.f32 0.0, %v858
        %860 = vdwg.mxu0
        %v865 = vcombine.low %v786, %v788
        %v866 = vcombine.low %v857, %v859
        %v868 = vunpack.c.l.s4 1983009808
        %v869 = vunpack.c.0.s8 %v868
        %v870 = vlaneseq
        %v871 = vshrl.u32 %v870, 7
        %v872 = vsub.s32 %v869, %v871
        %v873 = vrot.slane %v865, %v872
        %v875 = vunpack.c.l.s4 1983009808
        %v876 = vunpack.c.0.s8 %v875
        %v877 = vlaneseq
        %v878 = vshrl.u32 %v877, 7
        %v879 = vsub.s32 %v876, %v878
        %v880 = vrot.slane %v866, %v879
        %v881 = vcombine.low %v873, %v880
        %s883 = scalar_lea.vmem %s254, 16 [#allocation9]
        %884 = vst [vmem:[%s883] sm:$0xff] %v881
        %s885 = sld [smem:[#allocation2 + $0x180]]
        %v886 = vstv %s885
        %v887 = vmul.f32 %v263, %v886
        %s888 = sld [smem:[#allocation2 + $0x181]]
        %v889 = vstv %s888
        %v890 = vmul.f32 %v265, %v889
        %v891 = vadd.f32 %v887, %v890
        %s892 = sld [smem:[#allocation2 + $0x182]]
        %v893 = vstv %s892
        %v894 = vmul.f32 %v267, %v893
        %v895 = vadd.f32 %v891, %v894
        %s896 = sld [smem:[#allocation2 + $0x183]]
        %v897 = vstv %s896
        %v898 = vmul.f32 %v269, %v897
        %v899 = vadd.f32 %v895, %v898
        %s900 = sld [smem:[#allocation6 + $0x3]]
        %v901 = vstv %s900
        %v902 = vadd.f32 %v899, %v901
        %903 = vmatprep.subr.mxu0 %v271
        %904 = vmatpush1.msra.mxu0 %v270
        %905 = vmatprep.subr.mxu0 %v275
        %906 = vmatpush1.msra.mxu0 %v274
        %907 = vmatprep.subr.mxu0 %v279
        %908 = vmatpush1.msra.mxu0 %v278
        %909 = vmatprep.subr.mxu0 %v283
        %910 = vmatpush1.msra.mxu0 %v282
        %911 = vmatprep.subr.mxu0 %v287
        %912 = vmatpush1.msra.mxu0 %v286
        %913 = vmatprep.subr.mxu0 %v291
        %914 = vmatpush1.msra.mxu0 %v290
        %915 = vmatprep.subr.mxu0 %v295
        %916 = vmatpush1.msra.mxu0 %v294
        %917 = vmatprep.subr.mxu0 %v299
        %918 = vmatpush1.msra.mxu0 %v298
        %919 = vmatprep.subr.mxu0 %v303
        %920 = vmatpush1.msra.mxu0 %v302
        %921 = vmatprep.subr.mxu0 %v307
        %922 = vmatpush1.msra.mxu0 %v306
        %923 = vmatprep.subr.mxu0 %v311
        %924 = vmatpush1.msra.mxu0 %v310
        %925 = vmatprep.subr.mxu0 %v315
        %926 = vmatpush1.msra.mxu0 %v314
        %927 = vmatprep.subr.mxu0 %v319
        %928 = vmatpush1.msra.mxu0 %v318
        %929 = vmatprep.subr.mxu0 %v323
        %930 = vmatpush1.msra.mxu0 %v322
        %931 = vmatprep.subr.mxu0 %v327
        %932 = vmatpush1.msra.mxu0 %v326
        %933 = vmatprep.subr.mxu0 %v331
        %934 = vmatpush1.msra.mxu0 %v330
        %935 = vmatprep.subr.mxu0 0.0
        %936 = vmatpush1.msra.mxu0 0.0
        %937 = vmatprep.subr.mxu0 0.0
        %938 = vmatpush1.msra.mxu0 0.0
        %939 = vmatprep.subr.mxu0 0.0
        %940 = vmatpush1.msra.mxu0 0.0
        %941 = vmatprep.subr.mxu0 0.0
        %942 = vmatpush1.msra.mxu0 0.0
        %943 = vmatprep.subr.mxu0 0.0
        %944 = vmatpush1.msra.mxu0 0.0
        %945 = vmatprep.subr.mxu0 0.0
        %946 = vmatpush1.msra.mxu0 0.0
        %947 = vmatprep.subr.mxu0 0.0
        %948 = vmatpush1.msra.mxu0 0.0
        %949 = vmatprep.subr.mxu0 0.0
        %950 = vmatpush1.msra.mxu0 0.0
        %951 = vmatprep.subr.mxu0 0.0
        %952 = vmatpush1.msra.mxu0 0.0
        %953 = vmatprep.subr.mxu0 0.0
        %954 = vmatpush1.msra.mxu0 0.0
        %955 = vmatprep.subr.mxu0 0.0
        %956 = vmatpush1.msra.mxu0 0.0
        %957 = vmatprep.subr.mxu0 0.0
        %958 = vmatpush1.msra.mxu0 0.0
        %959 = vmatprep.subr.mxu0 0.0
        %960 = vmatpush1.msra.mxu0 0.0
        %961 = vmatprep.subr.mxu0 0.0
        %962 = vmatpush1.msra.mxu0 0.0
        %963 = vmatprep.subr.mxu0 0.0
        %964 = vmatpush1.msra.mxu0 0.0
        %965 = vmatprep.subr.mxu0 0.0
        %966 = vmatpush1.msra.mxu0 0.0
        %967 = vmatprep.mubr.f32.mxu0 0.0
        %968 = vmatmul.mubr.f32.gmra.mrb[0].mxu0 %v902
        %v969 = vpop.f32.mrb[0].mxu0
        %v970 = vadd.f32 0.0, %v969
        %v971 = vpop.f32.mrb[0].mxu0
        %v972 = vadd.f32 0.0, %v971
        %973 = vdwg.mxu0
        %974 = vmatprep.subr.mxu0 %v273
        %975 = vmatpush1.msra.mxu0 %v272
        %976 = vmatprep.subr.mxu0 %v277
        %977 = vmatpush1.msra.mxu0 %v276
        %978 = vmatprep.subr.mxu0 %v281
        %979 = vmatpush1.msra.mxu0 %v280
        %980 = vmatprep.subr.mxu0 %v285
        %981 = vmatpush1.msra.mxu0 %v284
        %982 = vmatprep.subr.mxu0 %v289
        %983 = vmatpush1.msra.mxu0 %v288
        %984 = vmatprep.subr.mxu0 %v293
        %985 = vmatpush1.msra.mxu0 %v292
        %986 = vmatprep.subr.mxu0 %v297
        %987 = vmatpush1.msra.mxu0 %v296
        %988 = vmatprep.subr.mxu0 %v301
        %989 = vmatpush1.msra.mxu0 %v300
        %990 = vmatprep.subr.mxu0 %v305
        %991 = vmatpush1.msra.mxu0 %v304
        %992 = vmatprep.subr.mxu0 %v309
        %993 = vmatpush1.msra.mxu0 %v308
        %994 = vmatprep.subr.mxu0 %v313
        %995 = vmatpush1.msra.mxu0 %v312
        %996 = vmatprep.subr.mxu0 %v317
        %997 = vmatpush1.msra.mxu0 %v316
        %998 = vmatprep.subr.mxu0 %v321
        %999 = vmatpush1.msra.mxu0 %v320
        %1000 = vmatprep.subr.mxu0 %v325
        %1001 = vmatpush1.msra.mxu0 %v324
        %1002 = vmatprep.subr.mxu0 %v329
        %1003 = vmatpush1.msra.mxu0 %v328
        %1004 = vmatprep.subr.mxu0 %v333
        %1005 = vmatpush1.msra.mxu0 %v332
        %1006 = vmatprep.subr.mxu0 0.0
        %1007 = vmatpush1.msra.mxu0 0.0
        %1008 = vmatprep.subr.mxu0 0.0
        %1009 = vmatpush1.msra.mxu0 0.0
        %1010 = vmatprep.subr.mxu0 0.0
        %1011 = vmatpush1.msra.mxu0 0.0
        %1012 = vmatprep.subr.mxu0 0.0
        %1013 = vmatpush1.msra.mxu0 0.0
        %1014 = vmatprep.subr.mxu0 0.0
        %1015 = vmatpush1.msra.mxu0 0.0
        %1016 = vmatprep.subr.mxu0 0.0
        %1017 = vmatpush1.msra.mxu0 0.0
        %1018 = vmatprep.subr.mxu0 0.0
        %1019 = vmatpush1.msra.mxu0 0.0
        %1020 = vmatprep.subr.mxu0 0.0
        %1021 = vmatpush1.msra.mxu0 0.0
        %1022 = vmatprep.subr.mxu0 0.0
        %1023 = vmatpush1.msra.mxu0 0.0
        %1024 = vmatprep.subr.mxu0 0.0
        %1025 = vmatpush1.msra.mxu0 0.0
        %1026 = vmatprep.subr.mxu0 0.0
        %1027 = vmatpush1.msra.mxu0 0.0
        %1028 = vmatprep.subr.mxu0 0.0
        %1029 = vmatpush1.msra.mxu0 0.0
        %1030 = vmatprep.subr.mxu0 0.0
        %1031 = vmatpush1.msra.mxu0 0.0
        %1032 = vmatprep.subr.mxu0 0.0
        %1033 = vmatpush1.msra.mxu0 0.0
        %1034 = vmatprep.subr.mxu0 0.0
        %1035 = vmatpush1.msra.mxu0 0.0
        %1036 = vmatprep.subr.mxu0 0.0
        %1037 = vmatpush1.msra.mxu0 0.0
        %1038 = vmatprep.mubr.f32.mxu0 0.0
        %1039 = vmatmul.mubr.f32.gmra.mrb[0].mxu0 %v902
        %v1040 = vpop.f32.mrb[0].mxu0
        %v1041 = vadd.f32 0.0, %v1040
        %v1042 = vpop.f32.mrb[0].mxu0
        %v1043 = vadd.f32 0.0, %v1042
        %1044 = vdwg.mxu0
        %v1049 = vcombine.low %v970, %v972
        %v1050 = vcombine.low %v1041, %v1043
        %v1052 = vunpack.c.l.s4 1983009808
        %v1053 = vunpack.c.0.s8 %v1052
        %v1054 = vlaneseq
        %v1055 = vshrl.u32 %v1054, 7
        %v1056 = vsub.s32 %v1053, %v1055
        %v1057 = vrot.slane %v1049, %v1056
        %v1059 = vunpack.c.l.s4 1983009808
        %v1060 = vunpack.c.0.s8 %v1059
        %v1061 = vlaneseq
        %v1062 = vshrl.u32 %v1061, 7
        %v1063 = vsub.s32 %v1060, %v1062
        %v1064 = vrot.slane %v1050, %v1063
        %v1065 = vcombine.low %v1057, %v1064
        %s1067 = scalar_lea.vmem %s254, 24 [#allocation9]
        %1068 = vst [vmem:[%s1067] sm:$0xff] %v1065
        %s1069 = sld [smem:[#allocation2 + $0x200]]
        %v1070 = vstv %s1069
        %v1071 = vmul.f32 %v263, %v1070
        %s1072 = sld [smem:[#allocation2 + $0x201]]
        %v1073 = vstv %s1072
        %v1074 = vmul.f32 %v265, %v1073
        %v1075 = vadd.f32 %v1071, %v1074
        %s1076 = sld [smem:[#allocation2 + $0x202]]
        %v1077 = vstv %s1076
        %v1078 = vmul.f32 %v267, %v1077
        %v1079 = vadd.f32 %v1075, %v1078
        %s1080 = sld [smem:[#allocation2 + $0x203]]
        %v1081 = vstv %s1080
        %v1082 = vmul.f32 %v269, %v1081
        %v1083 = vadd.f32 %v1079, %v1082
        %s1084 = sld [smem:[#allocation6 + $0x4]]
        %v1085 = vstv %s1084
        %v1086 = vadd.f32 %v1083, %v1085
        %1087 = vmatprep.subr.mxu0 %v271
        %1088 = vmatpush1.msra.mxu0 %v270
        %1089 = vmatprep.subr.mxu0 %v275
        %1090 = vmatpush1.msra.mxu0 %v274
        %1091 = vmatprep.subr.mxu0 %v279
        %1092 = vmatpush1.msra.mxu0 %v278
        %1093 = vmatprep.subr.mxu0 %v283
        %1094 = vmatpush1.msra.mxu0 %v282
        %1095 = vmatprep.subr.mxu0 %v287
        %1096 = vmatpush1.msra.mxu0 %v286
        %1097 = vmatprep.subr.mxu0 %v291
        %1098 = vmatpush1.msra.mxu0 %v290
        %1099 = vmatprep.subr.mxu0 %v295
        %1100 = vmatpush1.msra.mxu0 %v294
        %1101 = vmatprep.subr.mxu0 %v299
        %1102 = vmatpush1.msra.mxu0 %v298
        %1103 = vmatprep.subr.mxu0 %v303
        %1104 = vmatpush1.msra.mxu0 %v302
        %1105 = vmatprep.subr.mxu0 %v307
        %1106 = vmatpush1.msra.mxu0 %v306
        %1107 = vmatprep.subr.mxu0 %v311
        %1108 = vmatpush1.msra.mxu0 %v310
        %1109 = vmatprep.subr.mxu0 %v315
        %1110 = vmatpush1.msra.mxu0 %v314
        %1111 = vmatprep.subr.mxu0 %v319
        %1112 = vmatpush1.msra.mxu0 %v318
        %1113 = vmatprep.subr.mxu0 %v323
        %1114 = vmatpush1.msra.mxu0 %v322
        %1115 = vmatprep.subr.mxu0 %v327
        %1116 = vmatpush1.msra.mxu0 %v326
        %1117 = vmatprep.subr.mxu0 %v331
        %1118 = vmatpush1.msra.mxu0 %v330
        %1119 = vmatprep.subr.mxu0 0.0
        %1120 = vmatpush1.msra.mxu0 0.0
        %1121 = vmatprep.subr.mxu0 0.0
        %1122 = vmatpush1.msra.mxu0 0.0
        %1123 = vmatprep.subr.mxu0 0.0
        %1124 = vmatpush1.msra.mxu0 0.0
        %1125 = vmatprep.subr.mxu0 0.0
        %1126 = vmatpush1.msra.mxu0 0.0
        %1127 = vmatprep.subr.mxu0 0.0
        %1128 = vmatpush1.msra.mxu0 0.0
        %1129 = vmatprep.subr.mxu0 0.0
        %1130 = vmatpush1.msra.mxu0 0.0
        %1131 = vmatprep.subr.mxu0 0.0
        %1132 = vmatpush1.msra.mxu0 0.0
        %1133 = vmatprep.subr.mxu0 0.0
        %1134 = vmatpush1.msra.mxu0 0.0
        %1135 = vmatprep.subr.mxu0 0.0
        %1136 = vmatpush1.msra.mxu0 0.0
        %1137 = vmatprep.subr.mxu0 0.0
        %1138 = vmatpush1.msra.mxu0 0.0
        %1139 = vmatprep.subr.mxu0 0.0
        %1140 = vmatpush1.msra.mxu0 0.0
        %1141 = vmatprep.subr.mxu0 0.0
        %1142 = vmatpush1.msra.mxu0 0.0
        %1143 = vmatprep.subr.mxu0 0.0
        %1144 = vmatpush1.msra.mxu0 0.0
        %1145 = vmatprep.subr.mxu0 0.0
        %1146 = vmatpush1.msra.mxu0 0.0
        %1147 = vmatprep.subr.mxu0 0.0
        %1148 = vmatpush1.msra.mxu0 0.0
        %1149 = vmatprep.subr.mxu0 0.0
        %1150 = vmatpush1.msra.mxu0 0.0
        %1151 = vmatprep.mubr.f32.mxu0 0.0
        %1152 = vmatmul.mubr.f32.gmra.mrb[0].mxu0 %v1086
        %v1153 = vpop.f32.mrb[0].mxu0
        %v1154 = vadd.f32 0.0, %v1153
        %v1155 = vpop.f32.mrb[0].mxu0
        %v1156 = vadd.f32 0.0, %v1155
        %1157 = vdwg.mxu0
        %1158 = vmatprep.subr.mxu0 %v273
        %1159 = vmatpush1.msra.mxu0 %v272
        %1160 = vmatprep.subr.mxu0 %v277
        %1161 = vmatpush1.msra.mxu0 %v276
        %1162 = vmatprep.subr.mxu0 %v281
        %1163 = vmatpush1.msra.mxu0 %v280
        %1164 = vmatprep.subr.mxu0 %v285
        %1165 = vmatpush1.msra.mxu0 %v284
        %1166 = vmatprep.subr.mxu0 %v289
        %1167 = vmatpush1.msra.mxu0 %v288
        %1168 = vmatprep.subr.mxu0 %v293
        %1169 = vmatpush1.msra.mxu0 %v292
        %1170 = vmatprep.subr.mxu0 %v297
        %1171 = vmatpush1.msra.mxu0 %v296
        %1172 = vmatprep.subr.mxu0 %v301
        %1173 = vmatpush1.msra.mxu0 %v300
        %1174 = vmatprep.subr.mxu0 %v305
        %1175 = vmatpush1.msra.mxu0 %v304
        %1176 = vmatprep.subr.mxu0 %v309
        %1177 = vmatpush1.msra.mxu0 %v308
        %1178 = vmatprep.subr.mxu0 %v313
        %1179 = vmatpush1.msra.mxu0 %v312
        %1180 = vmatprep.subr.mxu0 %v317
        %1181 = vmatpush1.msra.mxu0 %v316
        %1182 = vmatprep.subr.mxu0 %v321
        %1183 = vmatpush1.msra.mxu0 %v320
        %1184 = vmatprep.subr.mxu0 %v325
        %1185 = vmatpush1.msra.mxu0 %v324
        %1186 = vmatprep.subr.mxu0 %v329
        %1187 = vmatpush1.msra.mxu0 %v328
        %1188 = vmatprep.subr.mxu0 %v333
        %1189 = vmatpush1.msra.mxu0 %v332
        %1190 = vmatprep.subr.mxu0 0.0
        %1191 = vmatpush1.msra.mxu0 0.0
        %1192 = vmatprep.subr.mxu0 0.0
        %1193 = vmatpush1.msra.mxu0 0.0
        %1194 = vmatprep.subr.mxu0 0.0
        %1195 = vmatpush1.msra.mxu0 0.0
        %1196 = vmatprep.subr.mxu0 0.0
        %1197 = vmatpush1.msra.mxu0 0.0
        %1198 = vmatprep.subr.mxu0 0.0
        %1199 = vmatpush1.msra.mxu0 0.0
        %1200 = vmatprep.subr.mxu0 0.0
        %1201 = vmatpush1.msra.mxu0 0.0
        %1202 = vmatprep.subr.mxu0 0.0
        %1203 = vmatpush1.msra.mxu0 0.0
        %1204 = vmatprep.subr.mxu0 0.0
        %1205 = vmatpush1.msra.mxu0 0.0
        %1206 = vmatprep.subr.mxu0 0.0
        %1207 = vmatpush1.msra.mxu0 0.0
        %1208 = vmatprep.subr.mxu0 0.0
        %1209 = vmatpush1.msra.mxu0 0.0
        %1210 = vmatprep.subr.mxu0 0.0
        %1211 = vmatpush1.msra.mxu0 0.0
        %1212 = vmatprep.subr.mxu0 0.0
        %1213 = vmatpush1.msra.mxu0 0.0
        %1214 = vmatprep.subr.mxu0 0.0
        %1215 = vmatpush1.msra.mxu0 0.0
        %1216 = vmatprep.subr.mxu0 0.0
        %1217 = vmatpush1.msra.mxu0 0.0
        %1218 = vmatprep.subr.mxu0 0.0
        %1219 = vmatpush1.msra.mxu0 0.0
        %1220 = vmatprep.subr.mxu0 0.0
        %1221 = vmatpush1.msra.mxu0 0.0
        %1222 = vmatprep.mubr.f32.mxu0 0.0
        %1223 = vmatmul.mubr.f32.gmra.mrb[0].mxu0 %v1086
        %v1224 = vpop.f32.mrb[0].mxu0
        %v1225 = vadd.f32 0.0, %v1224
        %v1226 = vpop.f32.mrb[0].mxu0
        %v1227 = vadd.f32 0.0, %v1226
        %1228 = vdwg.mxu0
        %v1233 = vcombine.low %v1154, %v1156
        %v1234 = vcombine.low %v1225, %v1227
        %v1236 = vunpack.c.l.s4 1983009808
        %v1237 = vunpack.c.0.s8 %v1236
        %v1238 = vlaneseq
        %v1239 = vshrl.u32 %v1238, 7
        %v1240 = vsub.s32 %v1237, %v1239
        %v1241 = vrot.slane %v1233, %v1240
        %v1243 = vunpack.c.l.s4 1983009808
        %v1244 = vunpack.c.0.s8 %v1243
        %v1245 = vlaneseq
        %v1246 = vshrl.u32 %v1245, 7
        %v1247 = vsub.s32 %v1244, %v1246
        %v1248 = vrot.slane %v1234, %v1247
        %v1249 = vcombine.low %v1241, %v1248
        %s1251 = scalar_lea.vmem %s254, 32 [#allocation9]
        %1252 = vst [vmem:[%s1251] sm:$0xff] %v1249
        %s1253 = sld [smem:[#allocation2 + $0x280]]
        %v1254 = vstv %s1253
        %v1255 = vmul.f32 %v263, %v1254
        %s1256 = sld [smem:[#allocation2 + $0x281]]
        %v1257 = vstv %s1256
        %v1258 = vmul.f32 %v265, %v1257
        %v1259 = vadd.f32 %v1255, %v1258
        %s1260 = sld [smem:[#allocation2 + $0x282]]
        %v1261 = vstv %s1260
        %v1262 = vmul.f32 %v267, %v1261
        %v1263 = vadd.f32 %v1259, %v1262
        %s1264 = sld [smem:[#allocation2 + $0x283]]
        %v1265 = vstv %s1264
        %v1266 = vmul.f32 %v269, %v1265
        %v1267 = vadd.f32 %v1263, %v1266
        %s1268 = sld [smem:[#allocation6 + $0x5]]
        %v1269 = vstv %s1268
        %v1270 = vadd.f32 %v1267, %v1269
        %1271 = vmatprep.subr.mxu0 %v271
        %1272 = vmatpush1.msra.mxu0 %v270
        %1273 = vmatprep.subr.mxu0 %v275
        %1274 = vmatpush1.msra.mxu0 %v274
        %1275 = vmatprep.subr.mxu0 %v279
        %1276 = vmatpush1.msra.mxu0 %v278
        %1277 = vmatprep.subr.mxu0 %v283
        %1278 = vmatpush1.msra.mxu0 %v282
        %1279 = vmatprep.subr.mxu0 %v287
        %1280 = vmatpush1.msra.mxu0 %v286
        %1281 = vmatprep.subr.mxu0 %v291
        %1282 = vmatpush1.msra.mxu0 %v290
        %1283 = vmatprep.subr.mxu0 %v295
        %1284 = vmatpush1.msra.mxu0 %v294
        %1285 = vmatprep.subr.mxu0 %v299
        %1286 = vmatpush1.msra.mxu0 %v298
        %1287 = vmatprep.subr.mxu0 %v303
        %1288 = vmatpush1.msra.mxu0 %v302
        %1289 = vmatprep.subr.mxu0 %v307
        %1290 = vmatpush1.msra.mxu0 %v306
        %1291 = vmatprep.subr.mxu0 %v311
        %1292 = vmatpush1.msra.mxu0 %v310
        %1293 = vmatprep.subr.mxu0 %v315
        %1294 = vmatpush1.msra.mxu0 %v314
        %1295 = vmatprep.subr.mxu0 %v319
        %1296 = vmatpush1.msra.mxu0 %v318
        %1297 = vmatprep.subr.mxu0 %v323
        %1298 = vmatpush1.msra.mxu0 %v322
        %1299 = vmatprep.subr.mxu0 %v327
        %1300 = vmatpush1.msra.mxu0 %v326
        %1301 = vmatprep.subr.mxu0 %v331
        %1302 = vmatpush1.msra.mxu0 %v330
        %1303 = vmatprep.subr.mxu0 0.0
        %1304 = vmatpush1.msra.mxu0 0.0
        %1305 = vmatprep.subr.mxu0 0.0
        %1306 = vmatpush1.msra.mxu0 0.0
        %1307 = vmatprep.subr.mxu0 0.0
        %1308 = vmatpush1.msra.mxu0 0.0
        %1309 = vmatprep.subr.mxu0 0.0
        %1310 = vmatpush1.msra.mxu0 0.0
        %1311 = vmatprep.subr.mxu0 0.0
        %1312 = vmatpush1.msra.mxu0 0.0
        %1313 = vmatprep.subr.mxu0 0.0
        %1314 = vmatpush1.msra.mxu0 0.0
        %1315 = vmatprep.subr.mxu0 0.0
        %1316 = vmatpush1.msra.mxu0 0.0
        %1317 = vmatprep.subr.mxu0 0.0
        %1318 = vmatpush1.msra.mxu0 0.0
        %1319 = vmatprep.subr.mxu0 0.0
        %1320 = vmatpush1.msra.mxu0 0.0
        %1321 = vmatprep.subr.mxu0 0.0
        %1322 = vmatpush1.msra.mxu0 0.0
        %1323 = vmatprep.subr.mxu0 0.0
        %1324 = vmatpush1.msra.mxu0 0.0
        %1325 = vmatprep.subr.mxu0 0.0
        %1326 = vmatpush1.msra.mxu0 0.0
        %1327 = vmatprep.subr.mxu0 0.0
        %1328 = vmatpush1.msra.mxu0 0.0
        %1329 = vmatprep.subr.mxu0 0.0
        %1330 = vmatpush1.msra.mxu0 0.0
        %1331 = vmatprep.subr.mxu0 0.0
        %1332 = vmatpush1.msra.mxu0 0.0
        %1333 = vmatprep.subr.mxu0 0.0
        %1334 = vmatpush1.msra.mxu0 0.0
        %1335 = vmatprep.mubr.f32.mxu0 0.0
        %1336 = vmatmul.mubr.f32.gmra.mrb[0].mxu0 %v1270
        %v1337 = vpop.f32.mrb[0].mxu0
        %v1338 = vadd.f32 0.0, %v1337
        %v1339 = vpop.f32.mrb[0].mxu0
        %v1340 = vadd.f32 0.0, %v1339
        %1341 = vdwg.mxu0
        %1342 = vmatprep.subr.mxu0 %v273
        %1343 = vmatpush1.msra.mxu0 %v272
        %1344 = vmatprep.subr.mxu0 %v277
        %1345 = vmatpush1.msra.mxu0 %v276
        %1346 = vmatprep.subr.mxu0 %v281
        %1347 = vmatpush1.msra.mxu0 %v280
        %1348 = vmatprep.subr.mxu0 %v285
        %1349 = vmatpush1.msra.mxu0 %v284
        %1350 = vmatprep.subr.mxu0 %v289
        %1351 = vmatpush1.msra.mxu0 %v288
        %1352 = vmatprep.subr.mxu0 %v293
        %1353 = vmatpush1.msra.mxu0 %v292
        %1354 = vmatprep.subr.mxu0 %v297
        %1355 = vmatpush1.msra.mxu0 %v296
        %1356 = vmatprep.subr.mxu0 %v301
        %1357 = vmatpush1.msra.mxu0 %v300
        %1358 = vmatprep.subr.mxu0 %v305
        %1359 = vmatpush1.msra.mxu0 %v304
        %1360 = vmatprep.subr.mxu0 %v309
        %1361 = vmatpush1.msra.mxu0 %v308
        %1362 = vmatprep.subr.mxu0 %v313
        %1363 = vmatpush1.msra.mxu0 %v312
        %1364 = vmatprep.subr.mxu0 %v317
        %1365 = vmatpush1.msra.mxu0 %v316
        %1366 = vmatprep.subr.mxu0 %v321
        %1367 = vmatpush1.msra.mxu0 %v320
        %1368 = vmatprep.subr.mxu0 %v325
        %1369 = vmatpush1.msra.mxu0 %v324
        %1370 = vmatprep.subr.mxu0 %v329
        %1371 = vmatpush1.msra.mxu0 %v328
        %1372 = vmatprep.subr.mxu0 %v333
        %1373 = vmatpush1.msra.mxu0 %v332
        %1374 = vmatprep.subr.mxu0 0.0
        %1375 = vmatpush1.msra.mxu0 0.0
        %1376 = vmatprep.subr.mxu0 0.0
        %1377 = vmatpush1.msra.mxu0 0.0
        %1378 = vmatprep.subr.mxu0 0.0
        %1379 = vmatpush1.msra.mxu0 0.0
        %1380 = vmatprep.subr.mxu0 0.0
        %1381 = vmatpush1.msra.mxu0 0.0
        %1382 = vmatprep.subr.mxu0 0.0
        %1383 = vmatpush1.msra.mxu0 0.0
        %1384 = vmatprep.subr.mxu0 0.0
        %1385 = vmatpush1.msra.mxu0 0.0
        %1386 = vmatprep.subr.mxu0 0.0
        %1387 = vmatpush1.msra.mxu0 0.0
        %1388 = vmatprep.subr.mxu0 0.0
        %1389 = vmatpush1.msra.mxu0 0.0
        %1390 = vmatprep.subr.mxu0 0.0
        %1391 = vmatpush1.msra.mxu0 0.0
        %1392 = vmatprep.subr.mxu0 0.0
        %1393 = vmatpush1.msra.mxu0 0.0
        %1394 = vmatprep.subr.mxu0 0.0
        %1395 = vmatpush1.msra.mxu0 0.0
        %1396 = vmatprep.subr.mxu0 0.0
        %1397 = vmatpush1.msra.mxu0 0.0
        %1398 = vmatprep.subr.mxu0 0.0
        %1399 = vmatpush1.msra.mxu0 0.0
        %1400 = vmatprep.subr.mxu0 0.0
        %1401 = vmatpush1.msra.mxu0 0.0
        %1402 = vmatprep.subr.mxu0 0.0
        %1403 = vmatpush1.msra.mxu0 0.0
        %1404 = vmatprep.subr.mxu0 0.0
        %1405 = vmatpush1.msra.mxu0 0.0
        %1406 = vmatprep.mubr.f32.mxu0 0.0
        %1407 = vmatmul.mubr.f32.gmra.mrb[0].mxu0 %v1270
        %v1408 = vpop.f32.mrb[0].mxu0
        %v1409 = vadd.f32 0.0, %v1408
        %v1410 = vpop.f32.mrb[0].mxu0
        %v1411 = vadd.f32 0.0, %v1410
        %1412 = vdwg.mxu0
        %v1417 = vcombine.low %v1338, %v1340
        %v1418 = vcombine.low %v1409, %v1411
        %v1420 = vunpack.c.l.s4 1983009808
        %v1421 = vunpack.c.0.s8 %v1420
        %v1422 = vlaneseq
        %v1423 = vshrl.u32 %v1422, 7
        %v1424 = vsub.s32 %v1421, %v1423
        %v1425 = vrot.slane %v1417, %v1424
        %v1427 = vunpack.c.l.s4 1983009808
        %v1428 = vunpack.c.0.s8 %v1427
        %v1429 = vlaneseq
        %v1430 = vshrl.u32 %v1429, 7
        %v1431 = vsub.s32 %v1428, %v1430
        %v1432 = vrot.slane %v1418, %v1431
        %v1433 = vcombine.low %v1425, %v1432
        %s1435 = scalar_lea.vmem %s254, 40 [#allocation9]
        %1436 = vst [vmem:[%s1435] sm:$0xff] %v1433
        %s1437 = sld [smem:[#allocation2 + $0x300]]
        %v1438 = vstv %s1437
        %v1439 = vmul.f32 %v263, %v1438
        %s1440 = sld [smem:[#allocation2 + $0x301]]
        %v1441 = vstv %s1440
        %v1442 = vmul.f32 %v265, %v1441
        %v1443 = vadd.f32 %v1439, %v1442
        %s1444 = sld [smem:[#allocation2 + $0x302]]
        %v1445 = vstv %s1444
        %v1446 = vmul.f32 %v267, %v1445
        %v1447 = vadd.f32 %v1443, %v1446
        %s1448 = sld [smem:[#allocation2 + $0x303]]
        %v1449 = vstv %s1448
        %v1450 = vmul.f32 %v269, %v1449
        %v1451 = vadd.f32 %v1447, %v1450
        %s1452 = sld [smem:[#allocation6 + $0x6]]
        %v1453 = vstv %s1452
        %v1454 = vadd.f32 %v1451, %v1453
        %1455 = vmatprep.subr.mxu0 %v271
        %1456 = vmatpush1.msra.mxu0 %v270
        %1457 = vmatprep.subr.mxu0 %v275
        %1458 = vmatpush1.msra.mxu0 %v274
        %1459 = vmatprep.subr.mxu0 %v279
        %1460 = vmatpush1.msra.mxu0 %v278
        %1461 = vmatprep.subr.mxu0 %v283
        %1462 = vmatpush1.msra.mxu0 %v282
        %1463 = vmatprep.subr.mxu0 %v287
        %1464 = vmatpush1.msra.mxu0 %v286
        %1465 = vmatprep.subr.mxu0 %v291
        %1466 = vmatpush1.msra.mxu0 %v290
        %1467 = vmatprep.subr.mxu0 %v295
        %1468 = vmatpush1.msra.mxu0 %v294
        %1469 = vmatprep.subr.mxu0 %v299
        %1470 = vmatpush1.msra.mxu0 %v298
        %1471 = vmatprep.subr.mxu0 %v303
        %1472 = vmatpush1.msra.mxu0 %v302
        %1473 = vmatprep.subr.mxu0 %v307
        %1474 = vmatpush1.msra.mxu0 %v306
        %1475 = vmatprep.subr.mxu0 %v311
        %1476 = vmatpush1.msra.mxu0 %v310
        %1477 = vmatprep.subr.mxu0 %v315
        %1478 = vmatpush1.msra.mxu0 %v314
        %1479 = vmatprep.subr.mxu0 %v319
        %1480 = vmatpush1.msra.mxu0 %v318
        %1481 = vmatprep.subr.mxu0 %v323
        %1482 = vmatpush1.msra.mxu0 %v322
        %1483 = vmatprep.subr.mxu0 %v327
        %1484 = vmatpush1.msra.mxu0 %v326
        %1485 = vmatprep.subr.mxu0 %v331
        %1486 = vmatpush1.msra.mxu0 %v330
        %1487 = vmatprep.subr.mxu0 0.0
        %1488 = vmatpush1.msra.mxu0 0.0
        %1489 = vmatprep.subr.mxu0 0.0
        %1490 = vmatpush1.msra.mxu0 0.0
        %1491 = vmatprep.subr.mxu0 0.0
        %1492 = vmatpush1.msra.mxu0 0.0
        %1493 = vmatprep.subr.mxu0 0.0
        %1494 = vmatpush1.msra.mxu0 0.0
        %1495 = vmatprep.subr.mxu0 0.0
        %1496 = vmatpush1.msra.mxu0 0.0
        %1497 = vmatprep.subr.mxu0 0.0
        %1498 = vmatpush1.msra.mxu0 0.0
        %1499 = vmatprep.subr.mxu0 0.0
        %1500 = vmatpush1.msra.mxu0 0.0
        %1501 = vmatprep.subr.mxu0 0.0
        %1502 = vmatpush1.msra.mxu0 0.0
        %1503 = vmatprep.subr.mxu0 0.0
        %1504 = vmatpush1.msra.mxu0 0.0
        %1505 = vmatprep.subr.mxu0 0.0
        %1506 = vmatpush1.msra.mxu0 0.0
        %1507 = vmatprep.subr.mxu0 0.0
        %1508 = vmatpush1.msra.mxu0 0.0
        %1509 = vmatprep.subr.mxu0 0.0
        %1510 = vmatpush1.msra.mxu0 0.0
        %1511 = vmatprep.subr.mxu0 0.0
        %1512 = vmatpush1.msra.mxu0 0.0
        %1513 = vmatprep.subr.mxu0 0.0
        %1514 = vmatpush1.msra.mxu0 0.0
        %1515 = vmatprep.subr.mxu0 0.0
        %1516 = vmatpush1.msra.mxu0 0.0
        %1517 = vmatprep.subr.mxu0 0.0
        %1518 = vmatpush1.msra.mxu0 0.0
        %1519 = vmatprep.mubr.f32.mxu0 0.0
        %1520 = vmatmul.mubr.f32.gmra.mrb[0].mxu0 %v1454
        %v1521 = vpop.f32.mrb[0].mxu0
        %v1522 = vadd.f32 0.0, %v1521
        %v1523 = vpop.f32.mrb[0].mxu0
        %v1524 = vadd.f32 0.0, %v1523
        %1525 = vdwg.mxu0
        %1526 = vmatprep.subr.mxu0 %v273
        %1527 = vmatpush1.msra.mxu0 %v272
        %1528 = vmatprep.subr.mxu0 %v277
        %1529 = vmatpush1.msra.mxu0 %v276
        %1530 = vmatprep.subr.mxu0 %v281
        %1531 = vmatpush1.msra.mxu0 %v280
        %1532 = vmatprep.subr.mxu0 %v285
        %1533 = vmatpush1.msra.mxu0 %v284
        %1534 = vmatprep.subr.mxu0 %v289
        %1535 = vmatpush1.msra.mxu0 %v288
        %1536 = vmatprep.subr.mxu0 %v293
        %1537 = vmatpush1.msra.mxu0 %v292
        %1538 = vmatprep.subr.mxu0 %v297
        %1539 = vmatpush1.msra.mxu0 %v296
        %1540 = vmatprep.subr.mxu0 %v301
        %1541 = vmatpush1.msra.mxu0 %v300
        %1542 = vmatprep.subr.mxu0 %v305
        %1543 = vmatpush1.msra.mxu0 %v304
        %1544 = vmatprep.subr.mxu0 %v309
        %1545 = vmatpush1.msra.mxu0 %v308
        %1546 = vmatprep.subr.mxu0 %v313
        %1547 = vmatpush1.msra.mxu0 %v312
        %1548 = vmatprep.subr.mxu0 %v317
        %1549 = vmatpush1.msra.mxu0 %v316
        %1550 = vmatprep.subr.mxu0 %v321
        %1551 = vmatpush1.msra.mxu0 %v320
        %1552 = vmatprep.subr.mxu0 %v325
        %1553 = vmatpush1.msra.mxu0 %v324
        %1554 = vmatprep.subr.mxu0 %v329
        %1555 = vmatpush1.msra.mxu0 %v328
        %1556 = vmatprep.subr.mxu0 %v333
        %1557 = vmatpush1.msra.mxu0 %v332
        %1558 = vmatprep.subr.mxu0 0.0
        %1559 = vmatpush1.msra.mxu0 0.0
        %1560 = vmatprep.subr.mxu0 0.0
        %1561 = vmatpush1.msra.mxu0 0.0
        %1562 = vmatprep.subr.mxu0 0.0
        %1563 = vmatpush1.msra.mxu0 0.0
        %1564 = vmatprep.subr.mxu0 0.0
        %1565 = vmatpush1.msra.mxu0 0.0
        %1566 = vmatprep.subr.mxu0 0.0
        %1567 = vmatpush1.msra.mxu0 0.0
        %1568 = vmatprep.subr.mxu0 0.0
        %1569 = vmatpush1.msra.mxu0 0.0
        %1570 = vmatprep.subr.mxu0 0.0
        %1571 = vmatpush1.msra.mxu0 0.0
        %1572 = vmatprep.subr.mxu0 0.0
        %1573 = vmatpush1.msra.mxu0 0.0
        %1574 = vmatprep.subr.mxu0 0.0
        %1575 = vmatpush1.msra.mxu0 0.0
        %1576 = vmatprep.subr.mxu0 0.0
        %1577 = vmatpush1.msra.mxu0 0.0
        %1578 = vmatprep.subr.mxu0 0.0
        %1579 = vmatpush1.msra.mxu0 0.0
        %1580 = vmatprep.subr.mxu0 0.0
        %1581 = vmatpush1.msra.mxu0 0.0
        %1582 = vmatprep.subr.mxu0 0.0
        %1583 = vmatpush1.msra.mxu0 0.0
        %1584 = vmatprep.subr.mxu0 0.0
        %1585 = vmatpush1.msra.mxu0 0.0
        %1586 = vmatprep.subr.mxu0 0.0
        %1587 = vmatpush1.msra.mxu0 0.0
        %1588 = vmatprep.subr.mxu0 0.0
        %1589 = vmatpush1.msra.mxu0 0.0
        %1590 = vmatprep.mubr.f32.mxu0 0.0
        %1591 = vmatmul.mubr.f32.gmra.mrb[0].mxu0 %v1454
        %v1592 = vpop.f32.mrb[0].mxu0
        %v1593 = vadd.f32 0.0, %v1592
        %v1594 = vpop.f32.mrb[0].mxu0
        %v1595 = vadd.f32 0.0, %v1594
        %1596 = vdwg.mxu0
        %v1601 = vcombine.low %v1522, %v1524
        %v1602 = vcombine.low %v1593, %v1595
        %v1604 = vunpack.c.l.s4 1983009808
        %v1605 = vunpack.c.0.s8 %v1604
        %v1606 = vlaneseq
        %v1607 = vshrl.u32 %v1606, 7
        %v1608 = vsub.s32 %v1605, %v1607
        %v1609 = vrot.slane %v1601, %v1608
        %v1611 = vunpack.c.l.s4 1983009808
        %v1612 = vunpack.c.0.s8 %v1611
        %v1613 = vlaneseq
        %v1614 = vshrl.u32 %v1613, 7
        %v1615 = vsub.s32 %v1612, %v1614
        %v1616 = vrot.slane %v1602, %v1615
        %v1617 = vcombine.low %v1609, %v1616
        %s1619 = scalar_lea.vmem %s254, 48 [#allocation9]
        %1620 = vst [vmem:[%s1619] sm:$0xff] %v1617
        %s1621 = sld [smem:[#allocation2 + $0x380]]
        %v1622 = vstv %s1621
        %v1623 = vmul.f32 %v263, %v1622
        %s1624 = sld [smem:[#allocation2 + $0x381]]
        %v1625 = vstv %s1624
        %v1626 = vmul.f32 %v265, %v1625
        %v1627 = vadd.f32 %v1623, %v1626
        %s1628 = sld [smem:[#allocation2 + $0x382]]
        %v1629 = vstv %s1628
        %v1630 = vmul.f32 %v267, %v1629
        %v1631 = vadd.f32 %v1627, %v1630
        %s1632 = sld [smem:[#allocation2 + $0x383]]
        %v1633 = vstv %s1632
        %v1634 = vmul.f32 %v269, %v1633
        %v1635 = vadd.f32 %v1631, %v1634
        %s1636 = sld [smem:[#allocation6 + $0x7]]
        %v1637 = vstv %s1636
        %v1638 = vadd.f32 %v1635, %v1637
        %1639 = vmatprep.subr.mxu0 %v271
        %1640 = vmatpush1.msra.mxu0 %v270
        %1641 = vmatprep.subr.mxu0 %v275
        %1642 = vmatpush1.msra.mxu0 %v274
        %1643 = vmatprep.subr.mxu0 %v279
        %1644 = vmatpush1.msra.mxu0 %v278
        %1645 = vmatprep.subr.mxu0 %v283
        %1646 = vmatpush1.msra.mxu0 %v282
        %1647 = vmatprep.subr.mxu0 %v287
        %1648 = vmatpush1.msra.mxu0 %v286
        %1649 = vmatprep.subr.mxu0 %v291
        %1650 = vmatpush1.msra.mxu0 %v290
        %1651 = vmatprep.subr.mxu0 %v295
        %1652 = vmatpush1.msra.mxu0 %v294
        %1653 = vmatprep.subr.mxu0 %v299
        %1654 = vmatpush1.msra.mxu0 %v298
        %1655 = vmatprep.subr.mxu0 %v303
        %1656 = vmatpush1.msra.mxu0 %v302
        %1657 = vmatprep.subr.mxu0 %v307
        %1658 = vmatpush1.msra.mxu0 %v306
        %1659 = vmatprep.subr.mxu0 %v311
        %1660 = vmatpush1.msra.mxu0 %v310
        %1661 = vmatprep.subr.mxu0 %v315
        %1662 = vmatpush1.msra.mxu0 %v314
        %1663 = vmatprep.subr.mxu0 %v319
        %1664 = vmatpush1.msra.mxu0 %v318
        %1665 = vmatprep.subr.mxu0 %v323
        %1666 = vmatpush1.msra.mxu0 %v322
        %1667 = vmatprep.subr.mxu0 %v327
        %1668 = vmatpush1.msra.mxu0 %v326
        %1669 = vmatprep.subr.mxu0 %v331
        %1670 = vmatpush1.msra.mxu0 %v330
        %1671 = vmatprep.subr.mxu0 0.0
        %1672 = vmatpush1.msra.mxu0 0.0
        %1673 = vmatprep.subr.mxu0 0.0
        %1674 = vmatpush1.msra.mxu0 0.0
        %1675 = vmatprep.subr.mxu0 0.0
        %1676 = vmatpush1.msra.mxu0 0.0
        %1677 = vmatprep.subr.mxu0 0.0
        %1678 = vmatpush1.msra.mxu0 0.0
        %1679 = vmatprep.subr.mxu0 0.0
        %1680 = vmatpush1.msra.mxu0 0.0
        %1681 = vmatprep.subr.mxu0 0.0
        %1682 = vmatpush1.msra.mxu0 0.0
        %1683 = vmatprep.subr.mxu0 0.0
        %1684 = vmatpush1.msra.mxu0 0.0
        %1685 = vmatprep.subr.mxu0 0.0
        %1686 = vmatpush1.msra.mxu0 0.0
        %1687 = vmatprep.subr.mxu0 0.0
        %1688 = vmatpush1.msra.mxu0 0.0
        %1689 = vmatprep.subr.mxu0 0.0
        %1690 = vmatpush1.msra.mxu0 0.0
        %1691 = vmatprep.subr.mxu0 0.0
        %1692 = vmatpush1.msra.mxu0 0.0
        %1693 = vmatprep.subr.mxu0 0.0
        %1694 = vmatpush1.msra.mxu0 0.0
        %1695 = vmatprep.subr.mxu0 0.0
        %1696 = vmatpush1.msra.mxu0 0.0
        %1697 = vmatprep.subr.mxu0 0.0
        %1698 = vmatpush1.msra.mxu0 0.0
        %1699 = vmatprep.subr.mxu0 0.0
        %1700 = vmatpush1.msra.mxu0 0.0
        %1701 = vmatprep.subr.mxu0 0.0
        %1702 = vmatpush1.msra.mxu0 0.0
        %1703 = vmatprep.mubr.f32.mxu0 0.0
        %1704 = vmatmul.mubr.f32.gmra.mrb[0].mxu0 %v1638
        %v1705 = vpop.f32.mrb[0].mxu0
        %v1706 = vadd.f32 0.0, %v1705
        %v1707 = vpop.f32.mrb[0].mxu0
        %v1708 = vadd.f32 0.0, %v1707
        %1709 = vdwg.mxu0
        %1710 = vmatprep.subr.mxu0 %v273
        %1711 = vmatpush1.msra.mxu0 %v272
        %1712 = vmatprep.subr.mxu0 %v277
        %1713 = vmatpush1.msra.mxu0 %v276
        %1714 = vmatprep.subr.mxu0 %v281
        %1715 = vmatpush1.msra.mxu0 %v280
        %1716 = vmatprep.subr.mxu0 %v285
        %1717 = vmatpush1.msra.mxu0 %v284
        %1718 = vmatprep.subr.mxu0 %v289
        %1719 = vmatpush1.msra.mxu0 %v288
        %1720 = vmatprep.subr.mxu0 %v293
        %1721 = vmatpush1.msra.mxu0 %v292
        %1722 = vmatprep.subr.mxu0 %v297
        %1723 = vmatpush1.msra.mxu0 %v296
        %1724 = vmatprep.subr.mxu0 %v301
        %1725 = vmatpush1.msra.mxu0 %v300
        %1726 = vmatprep.subr.mxu0 %v305
        %1727 = vmatpush1.msra.mxu0 %v304
        %1728 = vmatprep.subr.mxu0 %v309
        %1729 = vmatpush1.msra.mxu0 %v308
        %1730 = vmatprep.subr.mxu0 %v313
        %1731 = vmatpush1.msra.mxu0 %v312
        %1732 = vmatprep.subr.mxu0 %v317
        %1733 = vmatpush1.msra.mxu0 %v316
        %1734 = vmatprep.subr.mxu0 %v321
        %1735 = vmatpush1.msra.mxu0 %v320
        %1736 = vmatprep.subr.mxu0 %v325
        %1737 = vmatpush1.msra.mxu0 %v324
        %1738 = vmatprep.subr.mxu0 %v329
        %1739 = vmatpush1.msra.mxu0 %v328
        %1740 = vmatprep.subr.mxu0 %v333
        %1741 = vmatpush1.msra.mxu0 %v332
        %1742 = vmatprep.subr.mxu0 0.0
        %1743 = vmatpush1.msra.mxu0 0.0
        %1744 = vmatprep.subr.mxu0 0.0
        %1745 = vmatpush1.msra.mxu0 0.0
        %1746 = vmatprep.subr.mxu0 0.0
        %1747 = vmatpush1.msra.mxu0 0.0
        %1748 = vmatprep.subr.mxu0 0.0
        %1749 = vmatpush1.msra.mxu0 0.0
        %1750 = vmatprep.subr.mxu0 0.0
        %1751 = vmatpush1.msra.mxu0 0.0
        %1752 = vmatprep.subr.mxu0 0.0
        %1753 = vmatpush1.msra.mxu0 0.0
        %1754 = vmatprep.subr.mxu0 0.0
        %1755 = vmatpush1.msra.mxu0 0.0
        %1756 = vmatprep.subr.mxu0 0.0
        %1757 = vmatpush1.msra.mxu0 0.0
        %1758 = vmatprep.subr.mxu0 0.0
        %1759 = vmatpush1.msra.mxu0 0.0
        %1760 = vmatprep.subr.mxu0 0.0
        %1761 = vmatpush1.msra.mxu0 0.0
        %1762 = vmatprep.subr.mxu0 0.0
        %1763 = vmatpush1.msra.mxu0 0.0
        %1764 = vmatprep.subr.mxu0 0.0
        %1765 = vmatpush1.msra.mxu0 0.0
        %1766 = vmatprep.subr.mxu0 0.0
        %1767 = vmatpush1.msra.mxu0 0.0
        %1768 = vmatprep.subr.mxu0 0.0
        %1769 = vmatpush1.msra.mxu0 0.0
        %1770 = vmatprep.subr.mxu0 0.0
        %1771 = vmatpush1.msra.mxu0 0.0
        %1772 = vmatprep.subr.mxu0 0.0
        %1773 = vmatpush1.msra.mxu0 0.0
        %1774 = vmatprep.mubr.f32.mxu0 0.0
        %1775 = vmatmul.mubr.f32.gmra.mrb[0].mxu0 %v1638
        %v1776 = vpop.f32.mrb[0].mxu0
        %v1777 = vadd.f32 0.0, %v1776
        %v1778 = vpop.f32.mrb[0].mxu0
        %v1779 = vadd.f32 0.0, %v1778
        %1780 = vdwg.mxu0
        %v1785 = vcombine.low %v1706, %v1708
        %v1786 = vcombine.low %v1777, %v1779
        %v1788 = vunpack.c.l.s4 1983009808
        %v1789 = vunpack.c.0.s8 %v1788
        %v1790 = vlaneseq
        %v1791 = vshrl.u32 %v1790, 7
        %v1792 = vsub.s32 %v1789, %v1791
        %v1793 = vrot.slane %v1785, %v1792
        %v1795 = vunpack.c.l.s4 1983009808
        %v1796 = vunpack.c.0.s8 %v1795
        %v1797 = vlaneseq
        %v1798 = vshrl.u32 %v1797, 7
        %v1799 = vsub.s32 %v1796, %v1798
        %v1800 = vrot.slane %v1786, %v1799
        %v1801 = vcombine.low %v1793, %v1800
        %s1803 = scalar_lea.vmem %s254, 56 [#allocation9]
        %1804 = vst [vmem:[%s1803] sm:$0xff] %v1801
        %s1805 = sand.u32 %s134, 1
        %s1806 = scalar_lea.sflag [#allocation4], %s1805
        %s1807 = sand.u32 %s134, 1
        %s1808 = smul.addr %s1807, 64
        %s1809 = scalar_lea.vmem [#allocation9], %s1808
        // Predicated region
        $region49: #{tpu_custom_call.1} parent=35 // pred_check
          %p1810 = pneg %p144
        $region50: #{tpu_custom_call.1} parent=35 // pred_check_branch
          %1812 = sbr.rel (%p1810) target = $region52
        $region51: #{tpu_custom_call.1} parent=35 // pred_region
          %s1814 = ssub.s32 1024, 1024
          %1815 = vsyncadd %s1806, %s1814
          %s1816 = smul.addr %s26, 4
          %s1817 = smul.addr %s25, 32
          %s1818 = sadd.s32 %s1816, %s1817
          %s1819 = smul.addr %s1818, 32
          %s1820 = scalar_lea.hbm %s4, %s1819
          %s1821 = sshll.u32 %s1809, 4
          %s1822 = int_to_ptr.vmem [resolvable:$true] %s1821
          %1827 = dma.vmem_to_hbm [thread:$0]  %s1822, 1024, %s1820, %s1806, 128, 128, 8
        $region52: #{tpu_custom_call.1} parent=35 // pred_fallthru
          _
      $region36: #{tpu_custom_call.1} parent=5 // pred_fallthru
        _
      %p1828 = scmp.le.s32.totalorder 2, %s16
      // Predicated region
      $region53: #{tpu_custom_call.1} parent=5 // pred_check
        %p1829 = pneg %p1828
      $region54: #{tpu_custom_call.1} parent=5 // pred_check_branch
        %1831 = sbr.rel (%p1829) target = $region56
      $region55: #{tpu_custom_call.1} parent=5 // pred_region
        %s1832 = ssub.s32 %s16, 2
        // Predicated region
        $region57: #{tpu_custom_call.1} parent=55 // pred_check
          %p1833 = pneg %p150
        $region58: #{tpu_custom_call.1} parent=55 // pred_check_branch
          %1835 = sbr.rel (%p1833) target = $region60
        $region59: #{tpu_custom_call.1} parent=55 // pred_region
          %s1836 = sand.u32 %s135, 1
          %s1837 = scalar_lea.sflag [#allocation4], %s1836
          %s1838 = sand.u32 %s135, 1
          %s1839 = smul.addr %s1838, 64
          %s1840 = scalar_lea.vmem [#allocation9], %s1839
          %1841 = dma.done %s1837, 1024
        $region60: #{tpu_custom_call.1} parent=55 // pred_fallthru
          _
      $region56: #{tpu_custom_call.1} parent=5 // pred_fallthru
        _
    $region6: #{tpu_custom_call.1} parent=1 // loop_footer
      %s20 = sadd.s32 1, %s16
    $region7: #{tpu_custom_call.1} parent=1 // loop_footer_branch
      %15 = sbr.rel target = $region3
    $region8: #{tpu_custom_call.1} parent=1 // loop_exit
      _
    %1842 = vsyncpa [#allocation3], 1
    %s1843 = scalar_lea.sflag [#allocation3], 1
    %1844 = vsyncpa %s1843, 1
    %1845 = vsyncpa [#allocation4], 1
    %s1846 = scalar_lea.sflag [#allocation4], 1
    %1847 = vsyncpa %s1846, 1
    %1848 = vsyncpa [#allocation5], 1
    %s1849 = scalar_lea.sflag [#allocation5], 1
    %1850 = vsyncpa %s1849, 1
    %1851 = vsyncpa [#allocation7], 1

</llo_original>
